<compile_context>
chip_gen: v7x
topology: tpu7x:2x2x1
jax: 0.10.0
libtpu: 0.0.40
codegen_flags: <defaults>
</compile_context>

<pallas_src>
import functools

import numpy as np
import jax
import jax.numpy as jnp
from jax import lax
from jax.experimental import pallas as pl
from jax.experimental.pallas import tpu as pltpu


def _dense_block_kernel(x_ref, masks_ref, *refs, H, W, C_in, G, num_layers):
    """Fused DenseBlock for one batch element.

    x_ref:     (1, C_in, H*W)   input features, spatial flattened on lanes
    masks_ref: (9, 1, H*W)      per-tap 0/1 border masks (precomputed)
    refs:      for each layer l: scale_l (C_l, 1), shift_l (C_l, 1),
               w_l (G, 9*C_l)   -- then o_ref (1, C_in + L*G, H*W).
    The output block doubles as the VMEM-resident growing feature buffer.
    """
    o_ref = refs[3 * num_layers]
    HW = H * W

    # Seed the feature buffer with the (raw) input channels.
    o_ref[0, 0:C_in, :] = x_ref[0]

    c = C_in
    for l in range(num_layers):
        scale_ref = refs[3 * l + 0]
        shift_ref = refs[3 * l + 1]
        w_ref = refs[3 * l + 2]

        # Fused BatchNorm (inference) + ReLU over all current channels.
        a = o_ref[0, 0:c, :]                                    # (c, HW)
        a = jnp.maximum(a * scale_ref[...] + shift_ref[...], 0.0)

        # im2col: 9 lane-rolled, border-masked copies stacked along K.
        # shifted[p] = a[p + d] (masked where the 3x3 tap falls off the image).
        parts = []
        for t in range(9):
            oy, ox = t // 3 - 1, t % 3 - 1
            d = oy * W + ox
            if d == 0:
                parts.append(a)                                 # centre tap
            else:
                shifted = pltpu.roll(a, shift=(-d) % HW, axis=1)
                parts.append(shifted * masks_ref[t])
        slab = jnp.concatenate(parts, axis=0)                   # (9*c, HW)

        # Single MXU matmul: (G, 9*c) @ (9*c, HW) -> (G, HW), lane-dense out.
        out = jnp.dot(w_ref[...], slab, preferred_element_type=jnp.float32)

        # Dense concat: append the new channels in place.
        o_ref[0, c:c + G, :] = out.astype(o_ref.dtype)
        c += G


def _make_tap_masks(H, W):
    """(9, 1, H*W) float32 validity masks for the 3x3 taps (padding=1)."""
    yy, xx = np.meshgrid(np.arange(H), np.arange(W), indexing="ij")
    m = np.zeros((9, 1, H * W), np.float32)
    for t in range(9):
        oy, ox = t // 3 - 1, t % 3 - 1
        valid = ((yy + oy >= 0) & (yy + oy < H) &
                 (xx + ox >= 0) & (xx + ox < W))
        m[t, 0] = valid.reshape(-1).astype(np.float32)
    return jnp.asarray(m)


@jax.jit
def dense_block_forward(x_nchw, params):
    """Fused DenseBlock forward.  Input/output NCHW (matches PyTorch)."""
    N, C_in, H, W = x_nchw.shape
    num_layers = len(params)
    G = params[0]["w"].shape[-1]
    C_total = C_in + num_layers * G
    HW = H * W

    x_flat = x_nchw.reshape(N, C_in, HW)        # NCHW -> (N, C, H*W), free
    masks = _make_tap_masks(H, W)

    flat_inputs = []
    in_specs = [
        pl.BlockSpec((1, C_in, HW), lambda n: (n, 0, 0)),   # x (per batch)
        pl.BlockSpec((9, 1, HW), lambda n: (0, 0, 0)),      # tap masks
    ]
    c = C_in
    for p in params:
        # BN scale/shift as (C_l, 1) columns; conv weight as (G, 9*C_l) with
        # K ordered [tap-major, channel-minor] to match the im2col slab.
        scale2 = p["scale"].reshape(c, 1)
        shift2 = p["shift"].reshape(c, 1)
        w_mat = jnp.transpose(p["w"], (3, 0, 1, 2)).reshape(G, 9 * c)
        flat_inputs += [scale2, shift2, w_mat]
        in_specs += [
            pl.BlockSpec((c, 1), lambda n: (0, 0)),
            pl.BlockSpec((c, 1), lambda n: (0, 0)),
            pl.BlockSpec((G, 9 * c), lambda n: (0, 0)),
        ]
        c += G

    kernel = functools.partial(_dense_block_kernel, H=H, W=W, C_in=C_in,
                               G=G, num_layers=num_layers)

    out_flat = pl.pallas_call(
        kernel,
        out_shape=jax.ShapeDtypeStruct((N, C_total, HW), x_nchw.dtype),
        grid_spec=pltpu.PrefetchScalarGridSpec(
            num_scalar_prefetch=0,
            grid=(N,),                                   # batch axis
            in_specs=in_specs,
            out_specs=pl.BlockSpec((1, C_total, HW), lambda n: (n, 0, 0)),
        ),
        compiler_params=pltpu.CompilerParams(
            dimension_semantics=("parallel",)),          # feeds both v7x TCs
    )(x_flat, masks, *flat_inputs)

    return out_flat.reshape(N, C_total, H, W)            # (N,C,H*W) -> NCHW


def make_dense_block_params(key, in_channels, growth_rate, num_layers,
                            eps=1e-5):
    """Deterministic synthetic parameters (shapes match the PyTorch module)."""
    params = []
    c = in_channels
    for _ in range(num_layers):
        key, kw, kg, kb, km, kv = jax.random.split(key, 6)
        w = jax.random.normal(kw, (3, 3, c, growth_rate), jnp.float32) * 0.1
        gamma = 1.0 + 0.1 * jax.random.normal(kg, (c,), jnp.float32)
        beta = 0.1 * jax.random.normal(kb, (c,), jnp.float32)
        running_mean = 0.1 * jax.random.normal(km, (c,), jnp.float32)
        running_var = 0.5 + jnp.abs(jax.random.normal(kv, (c,), jnp.float32))
        scale = gamma / jnp.sqrt(running_var + eps)
        shift = beta - running_mean * scale
        params.append(dict(w=w, scale=scale, shift=shift))
        c += growth_rate
    return params


def dense_block_reference(x_nchw, params):
    """Plain-JAX reference (lax.conv) for a numerical check."""
    x = jnp.transpose(x_nchw, (0, 2, 3, 1))
    for p in params:
        a = jnp.maximum(x * p["scale"] + p["shift"], 0.0)
        out = lax.conv_general_dilated(
            a, p["w"], window_strides=(1, 1), padding="SAME",
            dimension_numbers=("NHWC", "HWIO", "NHWC"))
        x = jnp.concatenate([x, out], axis=-1)
    return jnp.transpose(x, (0, 3, 1, 2))


if __name__ == "__main__":
    # Small shapes consistent with the module: N=2, C=4, H=W=16,
    # growth_rate=4, num_layers=3  ->  output channels = 4 + 3*4 = 16.
    N, C, H, W = 2, 4, 16, 16
    growth_rate, num_layers = 4, 3

    key = jax.random.PRNGKey(0)
    key, kx = jax.random.split(key)
    x = jax.random.normal(kx, (N, C, H, W), jnp.float32)

    params = make_dense_block_params(key, C, growth_rate, num_layers)

    y = dense_block_forward(x, params)
    y = jax.block_until_ready(y)

    y_ref = dense_block_reference(x, params)
    assert y.shape == (N, C + growth_rate * num_layers, H, W), y.shape
    assert jnp.allclose(y, y_ref, atol=1e-4, rtol=1e-4), (
        float(jnp.max(jnp.abs(y - y_ref))))

    print("KERNEL_OK")
</pallas_src>

<mosaic_0001>
module attributes {stable_mosaic.version = 11 : i64} {
  func.func @_dense_block_kernel(%arg0: i32, %arg1: memref<1x4x256xf32, #tpu.memory_space<vmem>>, %arg2: memref<9x1x256xf32, #tpu.memory_space<vmem>>, %arg3: memref<4x1xf32, #tpu.memory_space<vmem>>, %arg4: memref<4x1xf32, #tpu.memory_space<vmem>>, %arg5: memref<4x36xf32, #tpu.memory_space<vmem>>, %arg6: memref<8x1xf32, #tpu.memory_space<vmem>>, %arg7: memref<8x1xf32, #tpu.memory_space<vmem>>, %arg8: memref<4x72xf32, #tpu.memory_space<vmem>>, %arg9: memref<12x1xf32, #tpu.memory_space<vmem>>, %arg10: memref<12x1xf32, #tpu.memory_space<vmem>>, %arg11: memref<4x108xf32, #tpu.memory_space<vmem>>, %arg12: memref<1x16x256xf32, #tpu.memory_space<vmem>>) attributes {dimension_semantics = [#tpu.dimension_semantics<parallel>], iteration_bounds = array<i64: 2>, scalar_prefetch = 0 : i64, scratch_operands = 0 : i64, tpu.core_type = #tpu.core_type<tc>, window_params = [{transform_indices = @transform_0, window_bounds = array<i64: 1, 4, 256>}, {pipeline_mode = #tpu.pipeline_mode<synchronous>, transform_indices = @transform_1, window_bounds = array<i64: 9, 1, 256>}, {pipeline_mode = #tpu.pipeline_mode<synchronous>, transform_indices = @transform_2, window_bounds = array<i64: 4, 1>}, {pipeline_mode = #tpu.pipeline_mode<synchronous>, transform_indices = @transform_3, window_bounds = array<i64: 4, 1>}, {pipeline_mode = #tpu.pipeline_mode<synchronous>, transform_indices = @transform_4, window_bounds = array<i64: 4, 36>}, {pipeline_mode = #tpu.pipeline_mode<synchronous>, transform_indices = @transform_5, window_bounds = array<i64: 8, 1>}, {pipeline_mode = #tpu.pipeline_mode<synchronous>, transform_indices = @transform_6, window_bounds = array<i64: 8, 1>}, {pipeline_mode = #tpu.pipeline_mode<synchronous>, transform_indices = @transform_7, window_bounds = array<i64: 4, 72>}, {pipeline_mode = #tpu.pipeline_mode<synchronous>, transform_indices = @transform_8, window_bounds = array<i64: 12, 1>}, {pipeline_mode = #tpu.pipeline_mode<synchronous>, transform_indices = @transform_9, window_bounds = array<i64: 12, 1>}, {pipeline_mode = #tpu.pipeline_mode<synchronous>, transform_indices = @transform_10, window_bounds = array<i64: 4, 108>}, {transform_indices = @transform_11, window_bounds = array<i64: 1, 16, 256>}]} {
    %c0 = arith.constant 0 : index
    %c0_0 = arith.constant 0 : index
    %c0_1 = arith.constant 0 : index
    %0 = vector.load %arg1[%c0, %c0_0, %c0_1] : memref<1x4x256xf32, #tpu.memory_space<vmem>>, vector<1x4x256xf32>
    %1 = vector.shape_cast %0 : vector<1x4x256xf32> to vector<4x256xf32>
    %c0_2 = arith.constant 0 : index
    %c0_3 = arith.constant 0 : index
    %c0_4 = arith.constant 0 : index
    %2 = vector.load %arg12[%c0_2, %c0_3, %c0_4] : memref<1x16x256xf32, #tpu.memory_space<vmem>>, vector<1x4x256xf32>
    %3 = vector.shape_cast %2 : vector<1x4x256xf32> to vector<4x256xf32>
    %4 = vector.shape_cast %1 : vector<4x256xf32> to vector<1x4x256xf32>
    tpu.vector_store %arg12[%c0_2, %c0_3, %c0_4], %4 {strides = array<i32>} : memref<1x16x256xf32, #tpu.memory_space<vmem>>, vector<1x4x256xf32>,
    %c0_5 = arith.constant 0 : index
    %c0_6 = arith.constant 0 : index
    %c0_7 = arith.constant 0 : index
    %5 = vector.load %arg12[%c0_5, %c0_6, %c0_7] : memref<1x16x256xf32, #tpu.memory_space<vmem>>, vector<1x4x256xf32>
    %6 = vector.shape_cast %5 : vector<1x4x256xf32> to vector<4x256xf32>
    %c0_8 = arith.constant 0 : index
    %c0_9 = arith.constant 0 : index
    %7 = vector.load %arg3[%c0_8, %c0_9] : memref<4x1xf32, #tpu.memory_space<vmem>>, vector<4x1xf32>
    %8 = vector.broadcast %7 : vector<4x1xf32> to vector<4x256xf32>
    %9 = arith.mulf %6, %8 : vector<4x256xf32>
    %c0_10 = arith.constant 0 : index
    %c0_11 = arith.constant 0 : index
    %10 = vector.load %arg4[%c0_10, %c0_11] : memref<4x1xf32, #tpu.memory_space<vmem>>, vector<4x1xf32>
    %11 = vector.broadcast %10 : vector<4x1xf32> to vector<4x256xf32>
    %12 = arith.addf %9, %11 : vector<4x256xf32>
    %cst = arith.constant 0.000000e+00 : f32
    %13 = vector.broadcast %cst : f32 to vector<4x256xf32>
    %14 = arith.maximumf %12, %13 : vector<4x256xf32>
    %c17_i32 = arith.constant 17 : i32
    %15 = tpu.dynamic_rotate %14 by %c17_i32 dim 1 : vector<4x256xf32>, i32 -> vector<4x256xf32>
    %c0_12 = arith.constant 0 : index
    %c0_13 = arith.constant 0 : index
    %c0_14 = arith.constant 0 : index
    %16 = vector.load %arg2[%c0_12, %c0_13, %c0_14] : memref<9x1x256xf32, #tpu.memory_space<vmem>>, vector<1x1x256xf32>
    %17 = vector.shape_cast %16 : vector<1x1x256xf32> to vector<1x256xf32>
    %18 = vector.broadcast %17 : vector<1x256xf32> to vector<4x256xf32>
    %19 = arith.mulf %15, %18 : vector<4x256xf32>
    %c16_i32 = arith.constant 16 : i32
    %20 = tpu.dynamic_rotate %14 by %c16_i32 dim 1 : vector<4x256xf32>, i32 -> vector<4x256xf32>
    %c1 = arith.constant 1 : index
    %c0_15 = arith.constant 0 : index
    %c0_16 = arith.constant 0 : index
    %21 = vector.load %arg2[%c1, %c0_15, %c0_16] : memref<9x1x256xf32, #tpu.memory_space<vmem>>, vector<1x1x256xf32>
    %22 = vector.shape_cast %21 : vector<1x1x256xf32> to vector<1x256xf32>
    %23 = vector.broadcast %22 : vector<1x256xf32> to vector<4x256xf32>
    %24 = arith.mulf %20, %23 : vector<4x256xf32>
    %c15_i32 = arith.constant 15 : i32
    %25 = tpu.dynamic_rotate %14 by %c15_i32 dim 1 : vector<4x256xf32>, i32 -> vector<4x256xf32>
    %c2 = arith.constant 2 : index
    %c0_17 = arith.constant 0 : index
    %c0_18 = arith.constant 0 : index
    %26 = vector.load %arg2[%c2, %c0_17, %c0_18] : memref<9x1x256xf32, #tpu.memory_space<vmem>>, vector<1x1x256xf32>
    %27 = vector.shape_cast %26 : vector<1x1x256xf32> to vector<1x256xf32>
    %28 = vector.broadcast %27 : vector<1x256xf32> to vector<4x256xf32>
    %29 = arith.mulf %25, %28 : vector<4x256xf32>
    %c1_i32 = arith.constant 1 : i32
    %30 = tpu.dynamic_rotate %14 by %c1_i32 dim 1 : vector<4x256xf32>, i32 -> vector<4x256xf32>
    %c3 = arith.constant 3 : index
    %c0_19 = arith.constant 0 : index
    %c0_20 = arith.constant 0 : index
    %31 = vector.load %arg2[%c3, %c0_19, %c0_20] : memref<9x1x256xf32, #tpu.memory_space<vmem>>, vector<1x1x256xf32>
    %32 = vector.shape_cast %31 : vector<1x1x256xf32> to vector<1x256xf32>
    %33 = vector.broadcast %32 : vector<1x256xf32> to vector<4x256xf32>
    %34 = arith.mulf %30, %33 : vector<4x256xf32>
    %c255_i32 = arith.constant 255 : i32
    %35 = tpu.dynamic_rotate %14 by %c255_i32 dim 1 : vector<4x256xf32>, i32 -> vector<4x256xf32>
    %c5 = arith.constant 5 : index
    %c0_21 = arith.constant 0 : index
    %c0_22 = arith.constant 0 : index
    %36 = vector.load %arg2[%c5, %c0_21, %c0_22] : memref<9x1x256xf32, #tpu.memory_space<vmem>>, vector<1x1x256xf32>
    %37 = vector.shape_cast %36 : vector<1x1x256xf32> to vector<1x256xf32>
    %38 = vector.broadcast %37 : vector<1x256xf32> to vector<4x256xf32>
    %39 = arith.mulf %35, %38 : vector<4x256xf32>
    %c241_i32 = arith.constant 241 : i32
    %40 = tpu.dynamic_rotate %14 by %c241_i32 dim 1 : vector<4x256xf32>, i32 -> vector<4x256xf32>
    %c6 = arith.constant 6 : index
    %c0_23 = arith.constant 0 : index
    %c0_24 = arith.constant 0 : index
    %41 = vector.load %arg2[%c6, %c0_23, %c0_24] : memref<9x1x256xf32, #tpu.memory_space<vmem>>, vector<1x1x256xf32>
    %42 = vector.shape_cast %41 : vector<1x1x256xf32> to vector<1x256xf32>
    %43 = vector.broadcast %42 : vector<1x256xf32> to vector<4x256xf32>
    %44 = arith.mulf %40, %43 : vector<4x256xf32>
    %c240_i32 = arith.constant 240 : i32
    %45 = tpu.dynamic_rotate %14 by %c240_i32 dim 1 : vector<4x256xf32>, i32 -> vector<4x256xf32>
    %c7 = arith.constant 7 : index
    %c0_25 = arith.constant 0 : index
    %c0_26 = arith.constant 0 : index
    %46 = vector.load %arg2[%c7, %c0_25, %c0_26] : memref<9x1x256xf32, #tpu.memory_space<vmem>>, vector<1x1x256xf32>
    %47 = vector.shape_cast %46 : vector<1x1x256xf32> to vector<1x256xf32>
    %48 = vector.broadcast %47 : vector<1x256xf32> to vector<4x256xf32>
    %49 = arith.mulf %45, %48 : vector<4x256xf32>
    %c239_i32 = arith.constant 239 : i32
    %50 = tpu.dynamic_rotate %14 by %c239_i32 dim 1 : vector<4x256xf32>, i32 -> vector<4x256xf32>
    %c8 = arith.constant 8 : index
    %c0_27 = arith.constant 0 : index
    %c0_28 = arith.constant 0 : index
    %51 = vector.load %arg2[%c8, %c0_27, %c0_28] : memref<9x1x256xf32, #tpu.memory_space<vmem>>, vector<1x1x256xf32>
    %52 = vector.shape_cast %51 : vector<1x1x256xf32> to vector<1x256xf32>
    %53 = vector.broadcast %52 : vector<1x256xf32> to vector<4x256xf32>
    %54 = arith.mulf %50, %53 : vector<4x256xf32>
    %55 = tpu.concatenate %19, %24, %29, %34, %14, %39, %44, %49, %54 in 0 : vector<4x256xf32>, vector<4x256xf32>, vector<4x256xf32>, vector<4x256xf32>, vector<4x256xf32>, vector<4x256xf32>, vector<4x256xf32>, vector<4x256xf32>, vector<4x256xf32> -> vector<36x256xf32>
    %c0_29 = arith.constant 0 : index
    %c0_30 = arith.constant 0 : index
    %56 = vector.load %arg5[%c0_29, %c0_30] : memref<4x36xf32, #tpu.memory_space<vmem>>, vector<4x36xf32>
    %cst_31 = arith.constant dense<0.000000e+00> : vector<4x256xf32>
    %57 = tpu.matmul %56, %55, %cst_31 {dimension_numbers = #tpu.dot_dimension_numbers<[1], [0], [0], [1], [0, 0, 1, 1], [], []>} : vector<4x36xf32>, vector<36x256xf32>, vector<4x256xf32> -> vector<4x256xf32>
    %c0_32 = arith.constant 0 : index
    %c4 = arith.constant 4 : index
    %c0_33 = arith.constant 0 : index
    %58 = vector.load %arg12[%c0_32, %c4, %c0_33] : memref<1x16x256xf32, #tpu.memory_space<vmem>>, vector<1x4x256xf32>
    %59 = vector.shape_cast %58 : vector<1x4x256xf32> to vector<4x256xf32>
    %60 = vector.shape_cast %57 : vector<4x256xf32> to vector<1x4x256xf32>
    tpu.vector_store %arg12[%c0_32, %c4, %c0_33], %60 {strides = array<i32>} : memref<1x16x256xf32, #tpu.memory_space<vmem>>, vector<1x4x256xf32>,
    %c0_34 = arith.constant 0 : index
    %c0_35 = arith.constant 0 : index
    %c0_36 = arith.constant 0 : index
    %61 = vector.load %arg12[%c0_34, %c0_35, %c0_36] : memref<1x16x256xf32, #tpu.memory_space<vmem>>, vector<1x8x256xf32>
    %62 = vector.shape_cast %61 : vector<1x8x256xf32> to vector<8x256xf32>
    %c0_37 = arith.constant 0 : index
    %c0_38 = arith.constant 0 : index
    %63 = vector.load %arg6[%c0_37, %c0_38] : memref<8x1xf32, #tpu.memory_space<vmem>>, vector<8x1xf32>
    %64 = vector.broadcast %63 : vector<8x1xf32> to vector<8x256xf32>
    %65 = arith.mulf %62, %64 : vector<8x256xf32>
    %c0_39 = arith.constant 0 : index
    %c0_40 = arith.constant 0 : index
    %66 = vector.load %arg7[%c0_39, %c0_40] : memref<8x1xf32, #tpu.memory_space<vmem>>, vector<8x1xf32>
    %67 = vector.broadcast %66 : vector<8x1xf32> to vector<8x256xf32>
    %68 = arith.addf %65, %67 : vector<8x256xf32>
    %cst_41 = arith.constant 0.000000e+00 : f32
    %69 = vector.broadcast %cst_41 : f32 to vector<8x256xf32>
    %70 = arith.maximumf %68, %69 : vector<8x256xf32>
    %c17_i32_42 = arith.constant 17 : i32
    %71 = tpu.dynamic_rotate %70 by %c17_i32_42 dim 1 : vector<8x256xf32>, i32 -> vector<8x256xf32>
    %c0_43 = arith.constant 0 : index
    %c0_44 = arith.constant 0 : index
    %c0_45 = arith.constant 0 : index
    %72 = vector.load %arg2[%c0_43, %c0_44, %c0_45] : memref<9x1x256xf32, #tpu.memory_space<vmem>>, vector<1x1x256xf32>
    %73 = vector.shape_cast %72 : vector<1x1x256xf32> to vector<1x256xf32>
    %74 = vector.broadcast %73 : vector<1x256xf32> to vector<8x256xf32>
    %75 = arith.mulf %71, %74 : vector<8x256xf32>
    %c16_i32_46 = arith.constant 16 : i32
    %76 = tpu.dynamic_rotate %70 by %c16_i32_46 dim 1 : vector<8x256xf32>, i32 -> vector<8x256xf32>
    %c1_47 = arith.constant 1 : index
    %c0_48 = arith.constant 0 : index
    %c0_49 = arith.constant 0 : index
    %77 = vector.load %arg2[%c1_47, %c0_48, %c0_49] : memref<9x1x256xf32, #tpu.memory_space<vmem>>, vector<1x1x256xf32>
    %78 = vector.shape_cast %77 : vector<1x1x256xf32> to vector<1x256xf32>
    %79 = vector.broadcast %78 : vector<1x256xf32> to vector<8x256xf32>
    %80 = arith.mulf %76, %79 : vector<8x256xf32>
    %c15_i32_50 = arith.constant 15 : i32
    %81 = tpu.dynamic_rotate %70 by %c15_i32_50 dim 1 : vector<8x256xf32>, i32 -> vector<8x256xf32>
    %c2_51 = arith.constant 2 : index
    %c0_52 = arith.constant 0 : index
    %c0_53 = arith.constant 0 : index
    %82 = vector.load %arg2[%c2_51, %c0_52, %c0_53] : memref<9x1x256xf32, #tpu.memory_space<vmem>>, vector<1x1x256xf32>
    %83 = vector.shape_cast %82 : vector<1x1x256xf32> to vector<1x256xf32>
    %84 = vector.broadcast %83 : vector<1x256xf32> to vector<8x256xf32>
    %85 = arith.mulf %81, %84 : vector<8x256xf32>
    %c1_i32_54 = arith.constant 1 : i32
    %86 = tpu.dynamic_rotate %70 by %c1_i32_54 dim 1 : vector<8x256xf32>, i32 -> vector<8x256xf32>
    %c3_55 = arith.constant 3 : index
    %c0_56 = arith.constant 0 : index
    %c0_57 = arith.constant 0 : index
    %87 = vector.load %arg2[%c3_55, %c0_56, %c0_57] : memref<9x1x256xf32, #tpu.memory_space<vmem>>, vector<1x1x256xf32>
    %88 = vector.shape_cast %87 : vector<1x1x256xf32> to vector<1x256xf32>
    %89 = vector.broadcast %88 : vector<1x256xf32> to vector<8x256xf32>
    %90 = arith.mulf %86, %89 : vector<8x256xf32>
    %c255_i32_58 = arith.constant 255 : i32
    %91 = tpu.dynamic_rotate %70 by %c255_i32_58 dim 1 : vector<8x256xf32>, i32 -> vector<8x256xf32>
    %c5_59 = arith.constant 5 : index
    %c0_60 = arith.constant 0 : index
    %c0_61 = arith.constant 0 : index
    %92 = vector.load %arg2[%c5_59, %c0_60, %c0_61] : memref<9x1x256xf32, #tpu.memory_space<vmem>>, vector<1x1x256xf32>
    %93 = vector.shape_cast %92 : vector<1x1x256xf32> to vector<1x256xf32>
    %94 = vector.broadcast %93 : vector<1x256xf32> to vector<8x256xf32>
    %95 = arith.mulf %91, %94 : vector<8x256xf32>
    %c241_i32_62 = arith.constant 241 : i32
    %96 = tpu.dynamic_rotate %70 by %c241_i32_62 dim 1 : vector<8x256xf32>, i32 -> vector<8x256xf32>
    %c6_63 = arith.constant 6 : index
    %c0_64 = arith.constant 0 : index
    %c0_65 = arith.constant 0 : index
    %97 = vector.load %arg2[%c6_63, %c0_64, %c0_65] : memref<9x1x256xf32, #tpu.memory_space<vmem>>, vector<1x1x256xf32>
    %98 = vector.shape_cast %97 : vector<1x1x256xf32> to vector<1x256xf32>
    %99 = vector.broadcast %98 : vector<1x256xf32> to vector<8x256xf32>
    %100 = arith.mulf %96, %99 : vector<8x256xf32>
    %c240_i32_66 = arith.constant 240 : i32
    %101 = tpu.dynamic_rotate %70 by %c240_i32_66 dim 1 : vector<8x256xf32>, i32 -> vector<8x256xf32>
    %c7_67 = arith.constant 7 : index
    %c0_68 = arith.constant 0 : index
    %c0_69 = arith.constant 0 : index
    %102 = vector.load %arg2[%c7_67, %c0_68, %c0_69] : memref<9x1x256xf32, #tpu.memory_space<vmem>>, vector<1x1x256xf32>
    %103 = vector.shape_cast %102 : vector<1x1x256xf32> to vector<1x256xf32>
    %104 = vector.broadcast %103 : vector<1x256xf32> to vector<8x256xf32>
    %105 = arith.mulf %101, %104 : vector<8x256xf32>
    %c239_i32_70 = arith.constant 239 : i32
    %106 = tpu.dynamic_rotate %70 by %c239_i32_70 dim 1 : vector<8x256xf32>, i32 -> vector<8x256xf32>
    %c8_71 = arith.constant 8 : index
    %c0_72 = arith.constant 0 : index
    %c0_73 = arith.constant 0 : index
    %107 = vector.load %arg2[%c8_71, %c0_72, %c0_73] : memref<9x1x256xf32, #tpu.memory_space<vmem>>, vector<1x1x256xf32>
    %108 = vector.shape_cast %107 : vector<1x1x256xf32> to vector<1x256xf32>
    %109 = vector.broadcast %108 : vector<1x256xf32> to vector<8x256xf32>
    %110 = arith.mulf %106, %109 : vector<8x256xf32>
    %111 = tpu.concatenate %75, %80, %85, %90, %70, %95, %100, %105, %110 in 0 : vector<8x256xf32>, vector<8x256xf32>, vector<8x256xf32>, vector<8x256xf32>, vector<8x256xf32>, vector<8x256xf32>, vector<8x256xf32>, vector<8x256xf32>, vector<8x256xf32> -> vector<72x256xf32>
    %c0_74 = arith.constant 0 : index
    %c0_75 = arith.constant 0 : index
    %112 = vector.load %arg8[%c0_74, %c0_75] : memref<4x72xf32, #tpu.memory_space<vmem>>, vector<4x72xf32>
    %cst_76 = arith.constant dense<0.000000e+00> : vector<4x256xf32>
    %113 = tpu.matmul %112, %111, %cst_76 {dimension_numbers = #tpu.dot_dimension_numbers<[1], [0], [0], [1], [0, 0, 1, 1], [], []>} : vector<4x72xf32>, vector<72x256xf32>, vector<4x256xf32> -> vector<4x256xf32>
    %c0_77 = arith.constant 0 : index
    %c8_78 = arith.constant 8 : index
    %c0_79 = arith.constant 0 : index
    %114 = vector.load %arg12[%c0_77, %c8_78, %c0_79] : memref<1x16x256xf32, #tpu.memory_space<vmem>>, vector<1x4x256xf32>
    %115 = vector.shape_cast %114 : vector<1x4x256xf32> to vector<4x256xf32>
    %116 = vector.shape_cast %113 : vector<4x256xf32> to vector<1x4x256xf32>
    tpu.vector_store %arg12[%c0_77, %c8_78, %c0_79], %116 {strides = array<i32>} : memref<1x16x256xf32, #tpu.memory_space<vmem>>, vector<1x4x256xf32>,
    %c0_80 = arith.constant 0 : index
    %c0_81 = arith.constant 0 : index
    %c0_82 = arith.constant 0 : index
    %117 = vector.load %arg12[%c0_80, %c0_81, %c0_82] : memref<1x16x256xf32, #tpu.memory_space<vmem>>, vector<1x12x256xf32>
    %118 = vector.shape_cast %117 : vector<1x12x256xf32> to vector<12x256xf32>
    %c0_83 = arith.constant 0 : index
    %c0_84 = arith.constant 0 : index
    %119 = vector.load %arg9[%c0_83, %c0_84] : memref<12x1xf32, #tpu.memory_space<vmem>>, vector<12x1xf32>
    %120 = vector.broadcast %119 : vector<12x1xf32> to vector<12x256xf32>
    %121 = arith.mulf %118, %120 : vector<12x256xf32>
    %c0_85 = arith.constant 0 : index
    %c0_86 = arith.constant 0 : index
    %122 = vector.load %arg10[%c0_85, %c0_86] : memref<12x1xf32, #tpu.memory_space<vmem>>, vector<12x1xf32>
    %123 = vector.broadcast %122 : vector<12x1xf32> to vector<12x256xf32>
    %124 = arith.addf %121, %123 : vector<12x256xf32>
    %cst_87 = arith.constant 0.000000e+00 : f32
    %125 = vector.broadcast %cst_87 : f32 to vector<12x256xf32>
    %126 = arith.maximumf %124, %125 : vector<12x256xf32>
    %c17_i32_88 = arith.constant 17 : i32
    %127 = tpu.dynamic_rotate %126 by %c17_i32_88 dim 1 : vector<12x256xf32>, i32 -> vector<12x256xf32>
    %c0_89 = arith.constant 0 : index
    %c0_90 = arith.constant 0 : index
    %c0_91 = arith.constant 0 : index
    %128 = vector.load %arg2[%c0_89, %c0_90, %c0_91] : memref<9x1x256xf32, #tpu.memory_space<vmem>>, vector<1x1x256xf32>
    %129 = vector.shape_cast %128 : vector<1x1x256xf32> to vector<1x256xf32>
    %130 = vector.broadcast %129 : vector<1x256xf32> to vector<12x256xf32>
    %131 = arith.mulf %127, %130 : vector<12x256xf32>
    %c16_i32_92 = arith.constant 16 : i32
    %132 = tpu.dynamic_rotate %126 by %c16_i32_92 dim 1 : vector<12x256xf32>, i32 -> vector<12x256xf32>
    %c1_93 = arith.constant 1 : index
    %c0_94 = arith.constant 0 : index
    %c0_95 = arith.constant 0 : index
    %133 = vector.load %arg2[%c1_93, %c0_94, %c0_95] : memref<9x1x256xf32, #tpu.memory_space<vmem>>, vector<1x1x256xf32>
    %134 = vector.shape_cast %133 : vector<1x1x256xf32> to vector<1x256xf32>
    %135 = vector.broadcast %134 : vector<1x256xf32> to vector<12x256xf32>
    %136 = arith.mulf %132, %135 : vector<12x256xf32>
    %c15_i32_96 = arith.constant 15 : i32
    %137 = tpu.dynamic_rotate %126 by %c15_i32_96 dim 1 : vector<12x256xf32>, i32 -> vector<12x256xf32>
    %c2_97 = arith.constant 2 : index
    %c0_98 = arith.constant 0 : index
    %c0_99 = arith.constant 0 : index
    %138 = vector.load %arg2[%c2_97, %c0_98, %c0_99] : memref<9x1x256xf32, #tpu.memory_space<vmem>>, vector<1x1x256xf32>
    %139 = vector.shape_cast %138 : vector<1x1x256xf32> to vector<1x256xf32>
    %140 = vector.broadcast %139 : vector<1x256xf32> to vector<12x256xf32>
    %141 = arith.mulf %137, %140 : vector<12x256xf32>
    %c1_i32_100 = arith.constant 1 : i32
    %142 = tpu.dynamic_rotate %126 by %c1_i32_100 dim 1 : vector<12x256xf32>, i32 -> vector<12x256xf32>
    %c3_101 = arith.constant 3 : index
    %c0_102 = arith.constant 0 : index
    %c0_103 = arith.constant 0 : index
    %143 = vector.load %arg2[%c3_101, %c0_102, %c0_103] : memref<9x1x256xf32, #tpu.memory_space<vmem>>, vector<1x1x256xf32>
    %144 = vector.shape_cast %143 : vector<1x1x256xf32> to vector<1x256xf32>
    %145 = vector.broadcast %144 : vector<1x256xf32> to vector<12x256xf32>
    %146 = arith.mulf %142, %145 : vector<12x256xf32>
    %c255_i32_104 = arith.constant 255 : i32
    %147 = tpu.dynamic_rotate %126 by %c255_i32_104 dim 1 : vector<12x256xf32>, i32 -> vector<12x256xf32>
    %c5_105 = arith.constant 5 : index
    %c0_106 = arith.constant 0 : index
    %c0_107 = arith.constant 0 : index
    %148 = vector.load %arg2[%c5_105, %c0_106, %c0_107] : memref<9x1x256xf32, #tpu.memory_space<vmem>>, vector<1x1x256xf32>
    %149 = vector.shape_cast %148 : vector<1x1x256xf32> to vector<1x256xf32>
    %150 = vector.broadcast %149 : vector<1x256xf32> to vector<12x256xf32>
    %151 = arith.mulf %147, %150 : vector<12x256xf32>
    %c241_i32_108 = arith.constant 241 : i32
    %152 = tpu.dynamic_rotate %126 by %c241_i32_108 dim 1 : vector<12x256xf32>, i32 -> vector<12x256xf32>
    %c6_109 = arith.constant 6 : index
    %c0_110 = arith.constant 0 : index
    %c0_111 = arith.constant 0 : index
    %153 = vector.load %arg2[%c6_109, %c0_110, %c0_111] : memref<9x1x256xf32, #tpu.memory_space<vmem>>, vector<1x1x256xf32>
    %154 = vector.shape_cast %153 : vector<1x1x256xf32> to vector<1x256xf32>
    %155 = vector.broadcast %154 : vector<1x256xf32> to vector<12x256xf32>
    %156 = arith.mulf %152, %155 : vector<12x256xf32>
    %c240_i32_112 = arith.constant 240 : i32
    %157 = tpu.dynamic_rotate %126 by %c240_i32_112 dim 1 : vector<12x256xf32>, i32 -> vector<12x256xf32>
    %c7_113 = arith.constant 7 : index
    %c0_114 = arith.constant 0 : index
    %c0_115 = arith.constant 0 : index
    %158 = vector.load %arg2[%c7_113, %c0_114, %c0_115] : memref<9x1x256xf32, #tpu.memory_space<vmem>>, vector<1x1x256xf32>
    %159 = vector.shape_cast %158 : vector<1x1x256xf32> to vector<1x256xf32>
    %160 = vector.broadcast %159 : vector<1x256xf32> to vector<12x256xf32>
    %161 = arith.mulf %157, %160 : vector<12x256xf32>
    %c239_i32_116 = arith.constant 239 : i32
    %162 = tpu.dynamic_rotate %126 by %c239_i32_116 dim 1 : vector<12x256xf32>, i32 -> vector<12x256xf32>
    %c8_117 = arith.constant 8 : index
    %c0_118 = arith.constant 0 : index
    %c0_119 = arith.constant 0 : index
    %163 = vector.load %arg2[%c8_117, %c0_118, %c0_119] : memref<9x1x256xf32, #tpu.memory_space<vmem>>, vector<1x1x256xf32>
    %164 = vector.shape_cast %163 : vector<1x1x256xf32> to vector<1x256xf32>
    %165 = vector.broadcast %164 : vector<1x256xf32> to vector<12x256xf32>
    %166 = arith.mulf %162, %165 : vector<12x256xf32>
    %167 = tpu.concatenate %131, %136, %141, %146, %126, %151, %156, %161, %166 in 0 : vector<12x256xf32>, vector<12x256xf32>, vector<12x256xf32>, vector<12x256xf32>, vector<12x256xf32>, vector<12x256xf32>, vector<12x256xf32>, vector<12x256xf32>, vector<12x256xf32> -> vector<108x256xf32>
    %c0_120 = arith.constant 0 : index
    %c0_121 = arith.constant 0 : index
    %168 = vector.load %arg11[%c0_120, %c0_121] : memref<4x108xf32, #tpu.memory_space<vmem>>, vector<4x108xf32>
    %cst_122 = arith.constant dense<0.000000e+00> : vector<4x256xf32>
    %169 = tpu.matmul %168, %167, %cst_122 {dimension_numbers = #tpu.dot_dimension_numbers<[1], [0], [0], [1], [0, 0, 1, 1], [], []>} : vector<4x108xf32>, vector<108x256xf32>, vector<4x256xf32> -> vector<4x256xf32>
    %c0_123 = arith.constant 0 : index
    %c12 = arith.constant 12 : index
    %c0_124 = arith.constant 0 : index
    %170 = vector.load %arg12[%c0_123, %c12, %c0_124] : memref<1x16x256xf32, #tpu.memory_space<vmem>>, vector<1x4x256xf32>
    %171 = vector.shape_cast %170 : vector<1x4x256xf32> to vector<4x256xf32>
    %172 = vector.shape_cast %169 : vector<4x256xf32> to vector<1x4x256xf32>
    tpu.vector_store %arg12[%c0_123, %c12, %c0_124], %172 {strides = array<i32>} : memref<1x16x256xf32, #tpu.memory_space<vmem>>, vector<1x4x256xf32>,
    return
  }
  func.func @transform_0(%arg0: i32) -> (i32, i32, i32) {
    %c0_i32 = arith.constant 0 : i32
    %c0_i32_0 = arith.constant 0 : i32
    %c0_i32_1 = arith.constant 0 : i32
    return %arg0, %c0_i32, %c0_i32_0 : i32, i32, i32
  }
  func.func @transform_1(%arg0: i32) -> (i32, i32, i32) {
    %c0_i32 = arith.constant 0 : i32
    %c0_i32_0 = arith.constant 0 : i32
    %c0_i32_1 = arith.constant 0 : i32
    %c0_i32_2 = arith.constant 0 : i32
    return %c0_i32, %c0_i32_0, %c0_i32_1 : i32, i32, i32
  }
  func.func @transform_2(%arg0: i32) -> (i32, i32) {
    %c0_i32 = arith.constant 0 : i32
    %c0_i32_0 = arith.constant 0 : i32
    %c0_i32_1 = arith.constant 0 : i32
    return %c0_i32, %c0_i32_0 : i32, i32
  }
  func.func @transform_3(%arg0: i32) -> (i32, i32) {
    %c0_i32 = arith.constant 0 : i32
    %c0_i32_0 = arith.constant 0 : i32
    %c0_i32_1 = arith.constant 0 : i32
    return %c0_i32, %c0_i32_0 : i32, i32
  }
  func.func @transform_4(%arg0: i32) -> (i32, i32) {
    %c0_i32 = arith.constant 0 : i32
    %c0_i32_0 = arith.constant 0 : i32
    %c0_i32_1 = arith.constant 0 : i32
    return %c0_i32, %c0_i32_0 : i32, i32
  }
  func.func @transform_5(%arg0: i32) -> (i32, i32) {
    %c0_i32 = arith.constant 0 : i32
    %c0_i32_0 = arith.constant 0 : i32
    %c0_i32_1 = arith.constant 0 : i32
    return %c0_i32, %c0_i32_0 : i32, i32
  }
  func.func @transform_6(%arg0: i32) -> (i32, i32) {
    %c0_i32 = arith.constant 0 : i32
    %c0_i32_0 = arith.constant 0 : i32
    %c0_i32_1 = arith.constant 0 : i32
    return %c0_i32, %c0_i32_0 : i32, i32
  }
  func.func @transform_7(%arg0: i32) -> (i32, i32) {
    %c0_i32 = arith.constant 0 : i32
    %c0_i32_0 = arith.constant 0 : i32
    %c0_i32_1 = arith.constant 0 : i32
    return %c0_i32, %c0_i32_0 : i32, i32
  }
  func.func @transform_8(%arg0: i32) -> (i32, i32) {
    %c0_i32 = arith.constant 0 : i32
    %c0_i32_0 = arith.constant 0 : i32
    %c0_i32_1 = arith.constant 0 : i32
    return %c0_i32, %c0_i32_0 : i32, i32
  }
  func.func @transform_9(%arg0: i32) -> (i32, i32) {
    %c0_i32 = arith.constant 0 : i32
    %c0_i32_0 = arith.constant 0 : i32
    %c0_i32_1 = arith.constant 0 : i32
    return %c0_i32, %c0_i32_0 : i32, i32
  }
  func.func @transform_10(%arg0: i32) -> (i32, i32) {
    %c0_i32 = arith.constant 0 : i32
    %c0_i32_0 = arith.constant 0 : i32
    %c0_i32_1 = arith.constant 0 : i32
    return %c0_i32, %c0_i32_0 : i32, i32
  }
  func.func @transform_11(%arg0: i32) -> (i32, i32, i32) {
    %c0_i32 = arith.constant 0 : i32
    %c0_i32_0 = arith.constant 0 : i32
    %c0_i32_1 = arith.constant 0 : i32
    return %arg0, %c0_i32, %c0_i32_0 : i32, i32, i32
  }
}

</mosaic_0001>

<llo_original>
// kernel: dense_block_forward.1
$region0: #{dense_block_forward.1}
  #allocation0 [shape = 'u32[]', space=smem, size = 0x4, offset = 0x4, fixed_abs, tag = 'smem constant byte address 0x4 - core index']
  #allocation1 [shape = 'u32[144,128]{1,0:T(1,128)}', space=vmem, size = 0x12000, scoped, tag = 'internal scratch']
  %s0 = inlined_call_operand.vmem [shape: f32[2,4,256], index: 0, kind: input, shape index: {}]
  %s1 = inlined_call_operand.vmem [shape: f32[9,1,256], index: 1, kind: input, shape index: {}]
  %s2 = inlined_call_operand.vmem [shape: f32[4,1], index: 2, kind: input, shape index: {}]
  %s3 = inlined_call_operand.vmem [shape: f32[4,1], index: 3, kind: input, shape index: {}]
  %s4 = inlined_call_operand.vmem [shape: f32[4,36], index: 4, kind: input, shape index: {}]
  %s5 = inlined_call_operand.vmem [shape: f32[8,1], index: 5, kind: input, shape index: {}]
  %s6 = inlined_call_operand.vmem [shape: f32[8,1], index: 6, kind: input, shape index: {}]
  %s7 = inlined_call_operand.vmem [shape: f32[4,72], index: 7, kind: input, shape index: {}]
  %s8 = inlined_call_operand.vmem [shape: f32[12,1], index: 8, kind: input, shape index: {}]
  %s9 = inlined_call_operand.vmem [shape: f32[12,1], index: 9, kind: input, shape index: {}]
  %s10 = inlined_call_operand.vmem [shape: f32[4,108], index: 10, kind: input, shape index: {}]
  %s11 = inlined_call_operand.vmem [shape: f32[2,16,256], index: 11, kind: output, shape index: {}]
  %s12 = sld [smem:[#allocation0]]
  $region77: #{dense_block_forward.1} parent=0
    _
  %s14 = ssub.s32 1, %s12
  %s15 = scalar_select 0, %s14, %s12
  loop: start=0, step=1, limit=4
  $region2: #{dense_block_forward.1} parent=0 // loop_pre_header
    _
  $region3: #{dense_block_forward.1} parent=0 // loop_header
    %s17 = sphi 0, %s21
    %p18 = scmp.ge.s32.totalorder %s17, 4
    %s27 = sphi 0, %s29
    %s30 = sphi 0, %s27
    %s31 = sphi 0, %s30
    %s47 = sphi 0, %s31
    %s51 = sphi 0, %s51
    %s53 = sphi 0, %s51
    %s54 = sphi 0, %s53
    %s68 = sphi 0, %s54
    %s72 = sphi 0, %s72
    %s74 = sphi 0, %s72
    %s75 = sphi 0, %s74
    %s89 = sphi 0, %s75
    %s93 = sphi 0, %s93
    %s95 = sphi 0, %s93
    %s96 = sphi 0, %s95
    %s110 = sphi 0, %s96
    %s114 = sphi 0, %s114
    %s116 = sphi 0, %s114
    %s117 = sphi 0, %s116
    %s131 = sphi 0, %s117
    %s135 = sphi 0, %s135
    %s137 = sphi 0, %s135
    %s138 = sphi 0, %s137
    %s152 = sphi 0, %s138
    %s156 = sphi 0, %s156
    %s158 = sphi 0, %s156
    %s159 = sphi 0, %s158
    %s173 = sphi 0, %s159
    %s177 = sphi 0, %s177
    %s179 = sphi 0, %s177
    %s180 = sphi 0, %s179
    %s194 = sphi 0, %s180
    %s198 = sphi 0, %s198
    %s200 = sphi 0, %s198
    %s201 = sphi 0, %s200
    %s215 = sphi 0, %s201
    %s219 = sphi 0, %s219
    %s221 = sphi 0, %s219
    %s222 = sphi 0, %s221
    %s236 = sphi 0, %s222
    %s240 = sphi 0, %s240
    %s242 = sphi 0, %s240
    %s243 = sphi 0, %s242
    %s257 = sphi 0, %s243
    %s263 = sphi 0, %s265
    %s266 = sphi 0, %s263
    %s267 = sphi 0, %s266
    %s283 = sphi 0, %s267
  $region4: #{dense_block_forward.1} parent=0 // loop_header_branch
    %20 = sbr.rel (%p18) target = $region8
  $region5: #{dense_block_forward.1} parent=0 // loop_body
    %s22 = ssub.s32 %s17, 1
    %s23 = ssub.s32 %s17, 2
    %s24 = sadd.s32 %s17, 1
    %s25 = ssub.s32 %s17, %s24
    %p26 = scmp.eq.s32.totalorder %s25, 0
    %s28 = sadd.s32 %s27, 1
    %s29 = scalar_select %p26, %s27, %s28
    %p32 = pneg %p26
    %p33 = scmp.eq.s32.totalorder %s17, 1
    %p34 = por %p32, %p33
    %p35 = scmp.ne.s32.totalorder %s27, %s30
    %p36 = scmp.eq.s32.totalorder %s17, 0
    %p37 = por %p35, %p36
    %p38 = scmp.ne.s32.totalorder %s27, %s30
    %p39 = scmp.eq.s32.totalorder %s22, 1
    %p40 = por %p38, %p39
    %p41 = scmp.ne.s32.totalorder %s30, %s31
    %p42 = scmp.eq.s32.totalorder %s22, 0
    %p43 = por %p41, %p42
    %p44 = scmp.ne.s32.totalorder %s30, %s31
    %p45 = scmp.eq.s32.totalorder %s23, 1
    %p46 = por %p44, %p45
    %p48 = scmp.ne.s32.totalorder %s31, %s47
    %p49 = scmp.eq.s32.totalorder %s23, 0
    %p50 = por %p48, %p49
    %s52 = sadd.s32 %s51, 1
    %p55 = scmp.eq.s32.totalorder %s17, 1
    %p56 = scmp.ne.s32.totalorder %s51, %s53
    %p57 = scmp.eq.s32.totalorder %s17, 0
    %p58 = por %p56, %p57
    %p59 = scmp.ne.s32.totalorder %s51, %s53
    %p60 = scmp.eq.s32.totalorder %s22, 1
    %p61 = por %p59, %p60
    %p62 = scmp.ne.s32.totalorder %s53, %s54
    %p63 = scmp.eq.s32.totalorder %s22, 0
    %p64 = por %p62, %p63
    %p65 = scmp.ne.s32.totalorder %s53, %s54
    %p66 = scmp.eq.s32.totalorder %s23, 1
    %p67 = por %p65, %p66
    %p69 = scmp.ne.s32.totalorder %s54, %s68
    %p70 = scmp.eq.s32.totalorder %s23, 0
    %p71 = por %p69, %p70
    %s73 = sadd.s32 %s72, 1
    %p76 = scmp.eq.s32.totalorder %s17, 1
    %p77 = scmp.ne.s32.totalorder %s72, %s74
    %p78 = scmp.eq.s32.totalorder %s17, 0
    %p79 = por %p77, %p78
    %p80 = scmp.ne.s32.totalorder %s72, %s74
    %p81 = scmp.eq.s32.totalorder %s22, 1
    %p82 = por %p80, %p81
    %p83 = scmp.ne.s32.totalorder %s74, %s75
    %p84 = scmp.eq.s32.totalorder %s22, 0
    %p85 = por %p83, %p84
    %p86 = scmp.ne.s32.totalorder %s74, %s75
    %p87 = scmp.eq.s32.totalorder %s23, 1
    %p88 = por %p86, %p87
    %p90 = scmp.ne.s32.totalorder %s75, %s89
    %p91 = scmp.eq.s32.totalorder %s23, 0
    %p92 = por %p90, %p91
    %s94 = sadd.s32 %s93, 1
    %p97 = scmp.eq.s32.totalorder %s17, 1
    %p98 = scmp.ne.s32.totalorder %s93, %s95
    %p99 = scmp.eq.s32.totalorder %s17, 0
    %p100 = por %p98, %p99
    %p101 = scmp.ne.s32.totalorder %s93, %s95
    %p102 = scmp.eq.s32.totalorder %s22, 1
    %p103 = por %p101, %p102
    %p104 = scmp.ne.s32.totalorder %s95, %s96
    %p105 = scmp.eq.s32.totalorder %s22, 0
    %p106 = por %p104, %p105
    %p107 = scmp.ne.s32.totalorder %s95, %s96
    %p108 = scmp.eq.s32.totalorder %s23, 1
    %p109 = por %p107, %p108
    %p111 = scmp.ne.s32.totalorder %s96, %s110
    %p112 = scmp.eq.s32.totalorder %s23, 0
    %p113 = por %p111, %p112
    %s115 = sadd.s32 %s114, 1
    %p118 = scmp.eq.s32.totalorder %s17, 1
    %p119 = scmp.ne.s32.totalorder %s114, %s116
    %p120 = scmp.eq.s32.totalorder %s17, 0
    %p121 = por %p119, %p120
    %p122 = scmp.ne.s32.totalorder %s114, %s116
    %p123 = scmp.eq.s32.totalorder %s22, 1
    %p124 = por %p122, %p123
    %p125 = scmp.ne.s32.totalorder %s116, %s117
    %p126 = scmp.eq.s32.totalorder %s22, 0
    %p127 = por %p125, %p126
    %p128 = scmp.ne.s32.totalorder %s116, %s117
    %p129 = scmp.eq.s32.totalorder %s23, 1
    %p130 = por %p128, %p129
    %p132 = scmp.ne.s32.totalorder %s117, %s131
    %p133 = scmp.eq.s32.totalorder %s23, 0
    %p134 = por %p132, %p133
    %s136 = sadd.s32 %s135, 1
    %p139 = scmp.eq.s32.totalorder %s17, 1
    %p140 = scmp.ne.s32.totalorder %s135, %s137
    %p141 = scmp.eq.s32.totalorder %s17, 0
    %p142 = por %p140, %p141
    %p143 = scmp.ne.s32.totalorder %s135, %s137
    %p144 = scmp.eq.s32.totalorder %s22, 1
    %p145 = por %p143, %p144
    %p146 = scmp.ne.s32.totalorder %s137, %s138
    %p147 = scmp.eq.s32.totalorder %s22, 0
    %p148 = por %p146, %p147
    %p149 = scmp.ne.s32.totalorder %s137, %s138
    %p150 = scmp.eq.s32.totalorder %s23, 1
    %p151 = por %p149, %p150
    %p153 = scmp.ne.s32.totalorder %s138, %s152
    %p154 = scmp.eq.s32.totalorder %s23, 0
    %p155 = por %p153, %p154
    %s157 = sadd.s32 %s156, 1
    %p160 = scmp.eq.s32.totalorder %s17, 1
    %p161 = scmp.ne.s32.totalorder %s156, %s158
    %p162 = scmp.eq.s32.totalorder %s17, 0
    %p163 = por %p161, %p162
    %p164 = scmp.ne.s32.totalorder %s156, %s158
    %p165 = scmp.eq.s32.totalorder %s22, 1
    %p166 = por %p164, %p165
    %p167 = scmp.ne.s32.totalorder %s158, %s159
    %p168 = scmp.eq.s32.totalorder %s22, 0
    %p169 = por %p167, %p168
    %p170 = scmp.ne.s32.totalorder %s158, %s159
    %p171 = scmp.eq.s32.totalorder %s23, 1
    %p172 = por %p170, %p171
    %p174 = scmp.ne.s32.totalorder %s159, %s173
    %p175 = scmp.eq.s32.totalorder %s23, 0
    %p176 = por %p174, %p175
    %s178 = sadd.s32 %s177, 1
    %p181 = scmp.eq.s32.totalorder %s17, 1
    %p182 = scmp.ne.s32.totalorder %s177, %s179
    %p183 = scmp.eq.s32.totalorder %s17, 0
    %p184 = por %p182, %p183
    %p185 = scmp.ne.s32.totalorder %s177, %s179
    %p186 = scmp.eq.s32.totalorder %s22, 1
    %p187 = por %p185, %p186
    %p188 = scmp.ne.s32.totalorder %s179, %s180
    %p189 = scmp.eq.s32.totalorder %s22, 0
    %p190 = por %p188, %p189
    %p191 = scmp.ne.s32.totalorder %s179, %s180
    %p192 = scmp.eq.s32.totalorder %s23, 1
    %p193 = por %p191, %p192
    %p195 = scmp.ne.s32.totalorder %s180, %s194
    %p196 = scmp.eq.s32.totalorder %s23, 0
    %p197 = por %p195, %p196
    %s199 = sadd.s32 %s198, 1
    %p202 = scmp.eq.s32.totalorder %s17, 1
    %p203 = scmp.ne.s32.totalorder %s198, %s200
    %p204 = scmp.eq.s32.totalorder %s17, 0
    %p205 = por %p203, %p204
    %p206 = scmp.ne.s32.totalorder %s198, %s200
    %p207 = scmp.eq.s32.totalorder %s22, 1
    %p208 = por %p206, %p207
    %p209 = scmp.ne.s32.totalorder %s200, %s201
    %p210 = scmp.eq.s32.totalorder %s22, 0
    %p211 = por %p209, %p210
    %p212 = scmp.ne.s32.totalorder %s200, %s201
    %p213 = scmp.eq.s32.totalorder %s23, 1
    %p214 = por %p212, %p213
    %p216 = scmp.ne.s32.totalorder %s201, %s215
    %p217 = scmp.eq.s32.totalorder %s23, 0
    %p218 = por %p216, %p217
    %s220 = sadd.s32 %s219, 1
    %p223 = scmp.eq.s32.totalorder %s17, 1
    %p224 = scmp.ne.s32.totalorder %s219, %s221
    %p225 = scmp.eq.s32.totalorder %s17, 0
    %p226 = por %p224, %p225
    %p227 = scmp.ne.s32.totalorder %s219, %s221
    %p228 = scmp.eq.s32.totalorder %s22, 1
    %p229 = por %p227, %p228
    %p230 = scmp.ne.s32.totalorder %s221, %s222
    %p231 = scmp.eq.s32.totalorder %s22, 0
    %p232 = por %p230, %p231
    %p233 = scmp.ne.s32.totalorder %s221, %s222
    %p234 = scmp.eq.s32.totalorder %s23, 1
    %p235 = por %p233, %p234
    %p237 = scmp.ne.s32.totalorder %s222, %s236
    %p238 = scmp.eq.s32.totalorder %s23, 0
    %p239 = por %p237, %p238
    %s241 = sadd.s32 %s240, 1
    %p244 = scmp.eq.s32.totalorder %s17, 1
    %p245 = scmp.ne.s32.totalorder %s240, %s242
    %p246 = scmp.eq.s32.totalorder %s17, 0
    %p247 = por %p245, %p246
    %p248 = scmp.ne.s32.totalorder %s240, %s242
    %p249 = scmp.eq.s32.totalorder %s22, 1
    %p250 = por %p248, %p249
    %p251 = scmp.ne.s32.totalorder %s242, %s243
    %p252 = scmp.eq.s32.totalorder %s22, 0
    %p253 = por %p251, %p252
    %p254 = scmp.ne.s32.totalorder %s242, %s243
    %p255 = scmp.eq.s32.totalorder %s23, 1
    %p256 = por %p254, %p255
    %p258 = scmp.ne.s32.totalorder %s243, %s257
    %p259 = scmp.eq.s32.totalorder %s23, 0
    %p260 = por %p258, %p259
    %s261 = ssub.s32 %s17, %s24
    %p262 = scmp.eq.s32.totalorder %s261, 0
    %s264 = sadd.s32 %s263, 1
    %s265 = scalar_select %p262, %s263, %s264
    %p268 = pneg %p262
    %p269 = scmp.eq.s32.totalorder %s17, 1
    %p270 = por %p268, %p269
    %p271 = scmp.ne.s32.totalorder %s263, %s266
    %p272 = scmp.eq.s32.totalorder %s17, 0
    %p273 = por %p271, %p272
    %p274 = scmp.ne.s32.totalorder %s263, %s266
    %p275 = scmp.eq.s32.totalorder %s22, 1
    %p276 = por %p274, %p275
    %p277 = scmp.ne.s32.totalorder %s266, %s267
    %p278 = scmp.eq.s32.totalorder %s22, 0
    %p279 = por %p277, %p278
    %p280 = scmp.ne.s32.totalorder %s266, %s267
    %p281 = scmp.eq.s32.totalorder %s23, 1
    %p282 = por %p280, %p281
    %p284 = scmp.ne.s32.totalorder %s267, %s283
    %p285 = scmp.eq.s32.totalorder %s23, 0
    %p286 = por %p284, %p285
    %p287 = scmp.le.s32.totalorder 1, %s17
    %p288 = scmp.lt.s32.totalorder %s17, 3
    %p289 = pnand %p287, %p288
    %p290 = pneg %p289
    // Predicated region
    $region9: #{dense_block_forward.1} parent=5 // pred_check
      _
    $region10: #{dense_block_forward.1} parent=5 // pred_check_branch
      %292 = sbr.rel (%p289) target = $region12
    $region11: #{dense_block_forward.1} parent=5 // pred_region
      %s293 = ssub.s32 %s17, 1
      // Predicated region
      $region13: #{dense_block_forward.1} parent=11 // pred_check
        %p294 = pneg %p64
      $region14: #{dense_block_forward.1} parent=11 // pred_check_branch
        %296 = sbr.rel (%p294) target = $region16
      $region15: #{dense_block_forward.1} parent=11 // pred_region
        _
      $region16: #{dense_block_forward.1} parent=11 // pred_fallthru
        _
      // Predicated region
      $region17: #{dense_block_forward.1} parent=11 // pred_check
        %p297 = pneg %p85
      $region18: #{dense_block_forward.1} parent=11 // pred_check_branch
        %299 = sbr.rel (%p297) target = $region20
      $region19: #{dense_block_forward.1} parent=11 // pred_region
        _
      $region20: #{dense_block_forward.1} parent=11 // pred_fallthru
        _
      // Predicated region
      $region21: #{dense_block_forward.1} parent=11 // pred_check
        %p300 = pneg %p106
      $region22: #{dense_block_forward.1} parent=11 // pred_check_branch
        %302 = sbr.rel (%p300) target = $region24
      $region23: #{dense_block_forward.1} parent=11 // pred_region
        _
      $region24: #{dense_block_forward.1} parent=11 // pred_fallthru
        _
      // Predicated region
      $region25: #{dense_block_forward.1} parent=11 // pred_check
        %p303 = pneg %p127
      $region26: #{dense_block_forward.1} parent=11 // pred_check_branch
        %305 = sbr.rel (%p303) target = $region28
      $region27: #{dense_block_forward.1} parent=11 // pred_region
        _
      $region28: #{dense_block_forward.1} parent=11 // pred_fallthru
        _
      // Predicated region
      $region29: #{dense_block_forward.1} parent=11 // pred_check
        %p306 = pneg %p148
      $region30: #{dense_block_forward.1} parent=11 // pred_check_branch
        %308 = sbr.rel (%p306) target = $region32
      $region31: #{dense_block_forward.1} parent=11 // pred_region
        _
      $region32: #{dense_block_forward.1} parent=11 // pred_fallthru
        _
      // Predicated region
      $region33: #{dense_block_forward.1} parent=11 // pred_check
        %p309 = pneg %p169
      $region34: #{dense_block_forward.1} parent=11 // pred_check_branch
        %311 = sbr.rel (%p309) target = $region36
      $region35: #{dense_block_forward.1} parent=11 // pred_region
        _
      $region36: #{dense_block_forward.1} parent=11 // pred_fallthru
        _
      // Predicated region
      $region37: #{dense_block_forward.1} parent=11 // pred_check
        %p312 = pneg %p190
      $region38: #{dense_block_forward.1} parent=11 // pred_check_branch
        %314 = sbr.rel (%p312) target = $region40
      $region39: #{dense_block_forward.1} parent=11 // pred_region
        _
      $region40: #{dense_block_forward.1} parent=11 // pred_fallthru
        _
      // Predicated region
      $region41: #{dense_block_forward.1} parent=11 // pred_check
        %p315 = pneg %p211
      $region42: #{dense_block_forward.1} parent=11 // pred_check_branch
        %317 = sbr.rel (%p315) target = $region44
      $region43: #{dense_block_forward.1} parent=11 // pred_region
        _
      $region44: #{dense_block_forward.1} parent=11 // pred_fallthru
        _
      // Predicated region
      $region45: #{dense_block_forward.1} parent=11 // pred_check
        %p318 = pneg %p232
      $region46: #{dense_block_forward.1} parent=11 // pred_check_branch
        %320 = sbr.rel (%p318) target = $region48
      $region47: #{dense_block_forward.1} parent=11 // pred_region
        _
      $region48: #{dense_block_forward.1} parent=11 // pred_fallthru
        _
      // Predicated region
      $region49: #{dense_block_forward.1} parent=11 // pred_check
        %p321 = pneg %p253
      $region50: #{dense_block_forward.1} parent=11 // pred_check_branch
        %323 = sbr.rel (%p321) target = $region52
      $region51: #{dense_block_forward.1} parent=11 // pred_region
        _
      $region52: #{dense_block_forward.1} parent=11 // pred_fallthru
        _
    $region12: #{dense_block_forward.1} parent=5 // pred_fallthru
      _
    %p324 = scmp.lt.s32.totalorder %s17, 2
    // Predicated region
    $region53: #{dense_block_forward.1} parent=5 // pred_check
      %p325 = pneg %p324
    $region54: #{dense_block_forward.1} parent=5 // pred_check_branch
      %327 = sbr.rel (%p325) target = $region56
    $region55: #{dense_block_forward.1} parent=5 // pred_region
      // Predicated region
      $region57: #{dense_block_forward.1} parent=55 // pred_check
        %p328 = pneg %p37
      $region58: #{dense_block_forward.1} parent=55 // pred_check_branch
        %330 = sbr.rel (%p328) target = $region60
      $region59: #{dense_block_forward.1} parent=55 // pred_region
        %p331 = scmp.lt.s32.totalorder %s17, 1
        %s332 = scalar_select %p331, %s17, 1
        %s333 = smul.addr %s332, 2
        %s334 = smul.addr %s333, 4
        %s335 = scalar_lea.vmem %s0, %s334
      $region60: #{dense_block_forward.1} parent=55 // pred_fallthru
        _
    $region56: #{dense_block_forward.1} parent=5 // pred_fallthru
      _
    %p336 = scmp.le.s32.totalorder 1, %s17
    %p337 = scmp.lt.s32.totalorder %s17, 3
    %p338 = pnand %p336, %p337
    %p339 = pneg %p338
    // Predicated region
    $region61: #{dense_block_forward.1} parent=5 // pred_check
      _
    $region62: #{dense_block_forward.1} parent=5 // pred_check_branch
      %341 = sbr.rel (%p338) target = $region64
    $region63: #{dense_block_forward.1} parent=5 // pred_region
      %s342 = ssub.s32 %s17, 1
      %p343 = scmp.lt.s32.totalorder %s22, 1
      %s344 = scalar_select %p343, %s22, 1
      %s345 = smul.addr %s344, 2
      %s346 = smul.addr %s345, 4
      %s347 = scalar_lea.vmem %s0, %s346
      %p348 = pneg %p43
      %p349 = pneg %p40
      %p350 = pneg %p64
      %p351 = pneg %p61
      %p352 = pneg %p85
      %p353 = pneg %p82
      %p354 = pneg %p106
      %p355 = pneg %p103
      %p356 = pneg %p127
      %p357 = pneg %p124
      %p358 = pneg %p148
      %p359 = pneg %p145
      %p360 = pneg %p169
      %p361 = pneg %p166
      %p362 = pneg %p190
      %p363 = pneg %p187
      %p364 = pneg %p211
      %p365 = pneg %p208
      %p366 = pneg %p232
      %p367 = pneg %p229
      %p368 = pneg %p253
      %p369 = pneg %p250
      %p370 = pneg %p279
      %p371 = pneg %p276
      %p372 = scmp.lt.s32.totalorder %s22, 1
      %s373 = scalar_select %p372, %s22, 1
      %s374 = smul.addr %s373, 4
      %s375 = smul.addr %s374, 8
      %s376 = scalar_lea.vmem %s11, %s375
      %p377 = scmp.lt.s32.totalorder %s22, 1
      %s378 = scalar_select %p377, %s22, 1
      %s379 = smul.addr %s378, 2
      %s380 = smul.addr %s379, 4
      %s381 = scalar_lea.vmem %s0, %s380
      %p382 = scmp.lt.s32.totalorder %s22, 1
      %s383 = scalar_select %p382, %s22, 1
      %s384 = smul.addr %s383, 4
      %s385 = smul.addr %s384, 8
      %s386 = scalar_lea.vmem %s11, %s385
      %v387 = vld [vmem:[%s381] sm:$0xff]
      %v389 = vcombine.high %v387, %v387
      %391 = vst [vmem:[%s386] sm:$0xf] %v387
      %392 = vst [vmem:[%s386 + $0x8] sm:$0xf] %v389
      %v393 = vld [vmem:[%s386] sm:$0xf]
      %v394 = vld [vmem:[%s386 + $0x8] sm:$0xf]
      %v395 = vld [vmem:[%s2] sm:$0xf]
      %397 = vset.pattern.permute.xlu0 0
      %398 = vperm.xlu0 %397, %v395
      %v399 = vpop.permute.xlu0 %398
      %v401 = vmul.f32 %v393, %v399
      %v402 = vmul.f32 %v394, %v399
      %v403 = vld [vmem:[%s3] sm:$0xf]
      %405 = vset.pattern.permute.xlu0 0
      %406 = vperm.xlu0 %405, %v403
      %v407 = vpop.permute.xlu0 %406
      %v409 = vadd.f32 %v401, %v407
      %v410 = vadd.f32 %v402, %v407
      %v411 = vmax.f32 %v409, 0.0
      %v412 = vmax.f32 %v410, 0.0
      %413 = vrot.lane.b32.xlu0 %v411, 17
      %v414 = vpop.permute.xlu0 %413
      %415 = vrot.lane.b32.xlu0 %v412, 17
      %v416 = vpop.permute.xlu0 %415
      %v417 = vlaneseq
      %v418 = vand.u32 %v417, 127
      %vm419 = vcmp.lt.s32.totalorder %v418, 17
      %v420 = vsel %vm419, %v414, %v416
      %v421 = vsel %vm419, %v416, %v414
      %v422 = vld [vmem:[%s1] sm:$0x3]
      %v424 = vlaneseq
      %v425 = vshrl.u32 %v424, 7
      %v426 = vsub.s32 0, %v425
      %v427 = vrot.slane %v422, %v426
      %v428 = vlaneseq
      %v429 = vshrl.u32 %v428, 7
      %v430 = vsub.s32 1, %v429
      %v431 = vrot.slane %v422, %v430
      %v434 = vmul.f32 %v421, %v427
      %v435 = vmul.f32 %v420, %v431
      %436 = vrot.lane.b32.xlu0 %v411, 16
      %v437 = vpop.permute.xlu0 %436
      %438 = vrot.lane.b32.xlu0 %v412, 16
      %v439 = vpop.permute.xlu0 %438
      %vm440 = vcmp.lt.s32.totalorder %v418, 16
      %v441 = vsel %vm440, %v437, %v439
      %v442 = vsel %vm440, %v439, %v437
      %s443 = scalar_lea.vmem %s1, 2
      %v444 = vld [vmem:[%s443] sm:$0x3]
      %v446 = vlaneseq
      %v447 = vshrl.u32 %v446, 7
      %v448 = vsub.s32 0, %v447
      %v449 = vrot.slane %v444, %v448
      %v450 = vlaneseq
      %v451 = vshrl.u32 %v450, 7
      %v452 = vsub.s32 1, %v451
      %v453 = vrot.slane %v444, %v452
      %v456 = vmul.f32 %v442, %v449
      %v457 = vmul.f32 %v441, %v453
      %458 = vrot.lane.b32.xlu0 %v411, 15
      %v459 = vpop.permute.xlu0 %458
      %460 = vrot.lane.b32.xlu0 %v412, 15
      %v461 = vpop.permute.xlu0 %460
      %vm462 = vcmp.lt.s32.totalorder %v418, 15
      %v463 = vsel %vm462, %v459, %v461
      %v464 = vsel %vm462, %v461, %v459
      %s465 = scalar_lea.vmem %s1, 4
      %v466 = vld [vmem:[%s465] sm:$0x3]
      %v468 = vlaneseq
      %v469 = vshrl.u32 %v468, 7
      %v470 = vsub.s32 0, %v469
      %v471 = vrot.slane %v466, %v470
      %v472 = vlaneseq
      %v473 = vshrl.u32 %v472, 7
      %v474 = vsub.s32 1, %v473
      %v475 = vrot.slane %v466, %v474
      %v478 = vmul.f32 %v464, %v471
      %v479 = vmul.f32 %v463, %v475
      %480 = vrot.lane.b32.xlu0 %v411, 1
      %v481 = vpop.permute.xlu0 %480
      %482 = vrot.lane.b32.xlu0 %v412, 1
      %v483 = vpop.permute.xlu0 %482
      %vm484 = vcmp.lt.s32.totalorder %v418, 1
      %v485 = vsel %vm484, %v481, %v483
      %v486 = vsel %vm484, %v483, %v481
      %s487 = scalar_lea.vmem %s1, 6
      %v488 = vld [vmem:[%s487] sm:$0x3]
      %v490 = vlaneseq
      %v491 = vshrl.u32 %v490, 7
      %v492 = vsub.s32 0, %v491
      %v493 = vrot.slane %v488, %v492
      %v494 = vlaneseq
      %v495 = vshrl.u32 %v494, 7
      %v496 = vsub.s32 1, %v495
      %v497 = vrot.slane %v488, %v496
      %v500 = vmul.f32 %v486, %v493
      %v501 = vmul.f32 %v485, %v497
      %502 = vrot.lane.b32.xlu0 %v411, 127
      %v503 = vpop.permute.xlu0 %502
      %504 = vrot.lane.b32.xlu0 %v412, 127
      %v505 = vpop.permute.xlu0 %504
      %vm506 = vcmp.lt.s32.totalorder %v418, 127
      %v507 = vsel %vm506, %v503, %v505
      %v508 = vsel %vm506, %v505, %v503
      %s509 = scalar_lea.vmem %s1, 10
      %v510 = vld [vmem:[%s509] sm:$0x3]
      %v512 = vlaneseq
      %v513 = vshrl.u32 %v512, 7
      %v514 = vsub.s32 0, %v513
      %v515 = vrot.slane %v510, %v514
      %v516 = vlaneseq
      %v517 = vshrl.u32 %v516, 7
      %v518 = vsub.s32 1, %v517
      %v519 = vrot.slane %v510, %v518
      %v522 = vmul.f32 %v507, %v515
      %v523 = vmul.f32 %v508, %v519
      %524 = vrot.lane.b32.xlu0 %v411, 113
      %v525 = vpop.permute.xlu0 %524
      %526 = vrot.lane.b32.xlu0 %v412, 113
      %v527 = vpop.permute.xlu0 %526
      %vm528 = vcmp.lt.s32.totalorder %v418, 113
      %v529 = vsel %vm528, %v525, %v527
      %v530 = vsel %vm528, %v527, %v525
      %s531 = scalar_lea.vmem %s1, 12
      %v532 = vld [vmem:[%s531] sm:$0x3]
      %v534 = vlaneseq
      %v535 = vshrl.u32 %v534, 7
      %v536 = vsub.s32 0, %v535
      %v537 = vrot.slane %v532, %v536
      %v538 = vlaneseq
      %v539 = vshrl.u32 %v538, 7
      %v540 = vsub.s32 1, %v539
      %v541 = vrot.slane %v532, %v540
      %v544 = vmul.f32 %v529, %v537
      %v545 = vmul.f32 %v530, %v541
      %546 = vrot.lane.b32.xlu0 %v411, 112
      %v547 = vpop.permute.xlu0 %546
      %548 = vrot.lane.b32.xlu0 %v412, 112
      %v549 = vpop.permute.xlu0 %548
      %vm550 = vcmp.lt.s32.totalorder %v418, 112
      %v551 = vsel %vm550, %v547, %v549
      %v552 = vsel %vm550, %v549, %v547
      %s553 = scalar_lea.vmem %s1, 14
      %v554 = vld [vmem:[%s553] sm:$0x3]
      %v556 = vlaneseq
      %v557 = vshrl.u32 %v556, 7
      %v558 = vsub.s32 0, %v557
      %v559 = vrot.slane %v554, %v558
      %v560 = vlaneseq
      %v561 = vshrl.u32 %v560, 7
      %v562 = vsub.s32 1, %v561
      %v563 = vrot.slane %v554, %v562
      %v566 = vmul.f32 %v551, %v559
      %v567 = vmul.f32 %v552, %v563
      %568 = vrot.lane.b32.xlu0 %v411, 111
      %v569 = vpop.permute.xlu0 %568
      %570 = vrot.lane.b32.xlu0 %v412, 111
      %v571 = vpop.permute.xlu0 %570
      %vm572 = vcmp.lt.s32.totalorder %v418, 111
      %v573 = vsel %vm572, %v569, %v571
      %v574 = vsel %vm572, %v571, %v569
      %s575 = scalar_lea.vmem %s1, 16
      %v576 = vld [vmem:[%s575] sm:$0x3]
      %v578 = vlaneseq
      %v579 = vshrl.u32 %v578, 7
      %v580 = vsub.s32 0, %v579
      %v581 = vrot.slane %v576, %v580
      %v582 = vlaneseq
      %v583 = vshrl.u32 %v582, 7
      %v584 = vsub.s32 1, %v583
      %v585 = vrot.slane %v576, %v584
      %v588 = vmul.f32 %v573, %v581
      %v589 = vmul.f32 %v574, %v585
      %v592 = vrot.slane %v456, 4
      %v593 = vrot.slane %v457, 4
      %v598 = vrot.slane %v500, 4
      %v599 = vrot.slane %v501, 4
      %v604 = vrot.slane %v522, 4
      %v605 = vrot.slane %v523, 4
      %v610 = vrot.slane %v566, 4
      %v611 = vrot.slane %v567, 4
      %vm614 = vcmask 1043456
      %v615 = vsel %vm614, %v434, %v592
      %v616 = vsel %vm614, %v435, %v593
      %v617 = vsel %vm614, %v478, %v598
      %v618 = vsel %vm614, %v479, %v599
      %v619 = vsel %vm614, %v411, %v604
      %v620 = vsel %vm614, %v412, %v605
      %v621 = vsel %vm614, %v544, %v610
      %v622 = vsel %vm614, %v545, %v611
      %v623 = vld [vmem:[%s4] sm:$0xf]
      %vm624 = vcmask 293888
      %v626 = vsel %vm624, %v623, 0
      %v629 = vsel %vm614, %v588, 0
      %v632 = vsel %vm614, %v589, 0
      %634 = vmatprep.subr.mxu0 %v616
      %635 = vmatpush1.msra.mxu0 %v615
      %636 = vmatprep.subr.mxu0 %v618
      %637 = vmatpush1.msra.mxu0 %v617
      %638 = vmatprep.subr.mxu0 %v620
      %639 = vmatpush1.msra.mxu0 %v619
      %640 = vmatprep.subr.mxu0 %v622
      %641 = vmatpush1.msra.mxu0 %v621
      %642 = vmatprep.subr.mxu0 %v632
      %643 = vmatpush1.msra.mxu0 %v629
      %644 = vmatprep.subr.mxu0 0.0
      %645 = vmatpush1.msra.mxu0 0.0
      %646 = vmatprep.subr.mxu0 0.0
      %647 = vmatpush1.msra.mxu0 0.0
      %648 = vmatprep.subr.mxu0 0.0
      %649 = vmatpush1.msra.mxu0 0.0
      %650 = vmatprep.subr.mxu0 0.0
      %651 = vmatpush1.msra.mxu0 0.0
      %652 = vmatprep.subr.mxu0 0.0
      %653 = vmatpush1.msra.mxu0 0.0
      %654 = vmatprep.subr.mxu0 0.0
      %655 = vmatpush1.msra.mxu0 0.0
      %656 = vmatprep.subr.mxu0 0.0
      %657 = vmatpush1.msra.mxu0 0.0
      %658 = vmatprep.subr.mxu0 0.0
      %659 = vmatpush1.msra.mxu0 0.0
      %660 = vmatprep.subr.mxu0 0.0
      %661 = vmatpush1.msra.mxu0 0.0
      %662 = vmatprep.subr.mxu0 0.0
      %663 = vmatpush1.msra.mxu0 0.0
      %664 = vmatprep.subr.mxu0 0.0
      %665 = vmatpush1.msra.mxu0 0.0
      %666 = vmatprep.subr.mxu0 0.0
      %667 = vmatpush1.msra.mxu0 0.0
      %668 = vmatprep.subr.mxu0 0.0
      %669 = vmatpush1.msra.mxu0 0.0
      %670 = vmatprep.subr.mxu0 0.0
      %671 = vmatpush1.msra.mxu0 0.0
      %672 = vmatprep.subr.mxu0 0.0
      %673 = vmatpush1.msra.mxu0 0.0
      %674 = vmatprep.subr.mxu0 0.0
      %675 = vmatpush1.msra.mxu0 0.0
      %676 = vmatprep.subr.mxu0 0.0
      %677 = vmatpush1.msra.mxu0 0.0
      %678 = vmatprep.subr.mxu0 0.0
      %679 = vmatpush1.msra.mxu0 0.0
      %680 = vmatprep.subr.mxu0 0.0
      %681 = vmatpush1.msra.mxu0 0.0
      %682 = vmatprep.subr.mxu0 0.0
      %683 = vmatpush1.msra.mxu0 0.0
      %684 = vmatprep.subr.mxu0 0.0
      %685 = vmatpush1.msra.mxu0 0.0
      %686 = vmatprep.subr.mxu0 0.0
      %687 = vmatpush1.msra.mxu0 0.0
      %688 = vmatprep.subr.mxu0 0.0
      %689 = vmatpush1.msra.mxu0 0.0
      %690 = vmatprep.subr.mxu0 0.0
      %691 = vmatpush1.msra.mxu0 0.0
      %692 = vmatprep.subr.mxu0 0.0
      %693 = vmatpush1.msra.mxu0 0.0
      %694 = vmatprep.subr.mxu0 0.0
      %695 = vmatpush1.msra.mxu0 0.0
      %696 = vmatprep.subr.mxu0 0.0
      %697 = vmatpush1.msra.mxu0 0.0
      %698 = vmatprep.mubr.f32.mxu0 0.0
      %699 = vmatmul.mubr.f32.gmra.mrb[0].mxu0 %v626
      %v700 = vpop.f32.mrb[0].mxu0
      %v701 = vadd.f32 0.0, %v700
      %v702 = vpop.f32.mrb[0].mxu0
      %v703 = vadd.f32 0.0, %v702
      %704 = vdwg.mxu0
      %v707 = vrot.slane %v701, 4
      %v708 = vrot.slane %v703, 4
      %711 = vst [vmem:[%s386] sm:$0xf0] %v707
      %712 = vst [vmem:[%s386 + $0x8] sm:$0xf0] %v708
      %v713 = vld [vmem:[%s386] sm:$0xff]
      %v714 = vld [vmem:[%s386 + $0x8] sm:$0xff]
      %v715 = vld [vmem:[%s5] sm:$0xff]
      %717 = vset.pattern.permute.xlu0 0
      %718 = vperm.xlu0 %717, %v715
      %v719 = vpop.permute.xlu0 %718
      %v721 = vmul.f32 %v713, %v719
      %v722 = vmul.f32 %v714, %v719
      %v723 = vld [vmem:[%s6] sm:$0xff]
      %725 = vset.pattern.permute.xlu0 0
      %726 = vperm.xlu0 %725, %v723
      %v727 = vpop.permute.xlu0 %726
      %v729 = vadd.f32 %v721, %v727
      %v730 = vadd.f32 %v722, %v727
      %v731 = vmax.f32 %v729, 0.0
      %v732 = vmax.f32 %v730, 0.0
      %733 = vrot.lane.b32.xlu0 %v731, 17
      %v734 = vpop.permute.xlu0 %733
      %735 = vrot.lane.b32.xlu0 %v732, 17
      %v736 = vpop.permute.xlu0 %735
      %v737 = vsel %vm419, %v734, %v736
      %v738 = vsel %vm419, %v736, %v734
      %v739 = vld [vmem:[%s1] sm:$0x3]
      %v741 = vlaneseq
      %v742 = vshrl.u32 %v741, 7
      %v743 = vsub.s32 0, %v742
      %v744 = vrot.slane %v739, %v743
      %v745 = vlaneseq
      %v746 = vshrl.u32 %v745, 7
      %v747 = vsub.s32 1, %v746
      %v748 = vrot.slane %v739, %v747
      %v751 = vmul.f32 %v738, %v744
      %v752 = vmul.f32 %v737, %v748
      %753 = vrot.lane.b32.xlu0 %v731, 16
      %v754 = vpop.permute.xlu0 %753
      %755 = vrot.lane.b32.xlu0 %v732, 16
      %v756 = vpop.permute.xlu0 %755
      %v757 = vsel %vm440, %v754, %v756
      %v758 = vsel %vm440, %v756, %v754
      %v759 = vld [vmem:[%s443] sm:$0x3]
      %v761 = vlaneseq
      %v762 = vshrl.u32 %v761, 7
      %v763 = vsub.s32 0, %v762
      %v764 = vrot.slane %v759, %v763
      %v765 = vlaneseq
      %v766 = vshrl.u32 %v765, 7
      %v767 = vsub.s32 1, %v766
      %v768 = vrot.slane %v759, %v767
      %v771 = vmul.f32 %v758, %v764
      %v772 = vmul.f32 %v757, %v768
      %773 = vrot.lane.b32.xlu0 %v731, 15
      %v774 = vpop.permute.xlu0 %773
      %775 = vrot.lane.b32.xlu0 %v732, 15
      %v776 = vpop.permute.xlu0 %775
      %v777 = vsel %vm462, %v774, %v776
      %v778 = vsel %vm462, %v776, %v774
      %v779 = vld [vmem:[%s465] sm:$0x3]
      %v781 = vlaneseq
      %v782 = vshrl.u32 %v781, 7
      %v783 = vsub.s32 0, %v782
      %v784 = vrot.slane %v779, %v783
      %v785 = vlaneseq
      %v786 = vshrl.u32 %v785, 7
      %v787 = vsub.s32 1, %v786
      %v788 = vrot.slane %v779, %v787
      %v791 = vmul.f32 %v778, %v784
      %v792 = vmul.f32 %v777, %v788
      %793 = vrot.lane.b32.xlu0 %v731, 1
      %v794 = vpop.permute.xlu0 %793
      %795 = vrot.lane.b32.xlu0 %v732, 1
      %v796 = vpop.permute.xlu0 %795
      %v797 = vsel %vm484, %v794, %v796
      %v798 = vsel %vm484, %v796, %v794
      %v799 = vld [vmem:[%s487] sm:$0x3]
      %v801 = vlaneseq
      %v802 = vshrl.u32 %v801, 7
      %v803 = vsub.s32 0, %v802
      %v804 = vrot.slane %v799, %v803
      %v805 = vlaneseq
      %v806 = vshrl.u32 %v805, 7
      %v807 = vsub.s32 1, %v806
      %v808 = vrot.slane %v799, %v807
      %v811 = vmul.f32 %v798, %v804
      %v812 = vmul.f32 %v797, %v808
      %813 = vrot.lane.b32.xlu0 %v731, 127
      %v814 = vpop.permute.xlu0 %813
      %815 = vrot.lane.b32.xlu0 %v732, 127
      %v816 = vpop.permute.xlu0 %815
      %v817 = vsel %vm506, %v814, %v816
      %v818 = vsel %vm506, %v816, %v814
      %v819 = vld [vmem:[%s509] sm:$0x3]
      %v821 = vlaneseq
      %v822 = vshrl.u32 %v821, 7
      %v823 = vsub.s32 0, %v822
      %v824 = vrot.slane %v819, %v823
      %v825 = vlaneseq
      %v826 = vshrl.u32 %v825, 7
      %v827 = vsub.s32 1, %v826
      %v828 = vrot.slane %v819, %v827
      %v831 = vmul.f32 %v817, %v824
      %v832 = vmul.f32 %v818, %v828
      %833 = vrot.lane.b32.xlu0 %v731, 113
      %v834 = vpop.permute.xlu0 %833
      %835 = vrot.lane.b32.xlu0 %v732, 113
      %v836 = vpop.permute.xlu0 %835
      %v837 = vsel %vm528, %v834, %v836
      %v838 = vsel %vm528, %v836, %v834
      %v839 = vld [vmem:[%s531] sm:$0x3]
      %v841 = vlaneseq
      %v842 = vshrl.u32 %v841, 7
      %v843 = vsub.s32 0, %v842
      %v844 = vrot.slane %v839, %v843
      %v845 = vlaneseq
      %v846 = vshrl.u32 %v845, 7
      %v847 = vsub.s32 1, %v846
      %v848 = vrot.slane %v839, %v847
      %v851 = vmul.f32 %v837, %v844
      %v852 = vmul.f32 %v838, %v848
      %853 = vrot.lane.b32.xlu0 %v731, 112
      %v854 = vpop.permute.xlu0 %853
      %855 = vrot.lane.b32.xlu0 %v732, 112
      %v856 = vpop.permute.xlu0 %855
      %v857 = vsel %vm550, %v854, %v856
      %v858 = vsel %vm550, %v856, %v854
      %v859 = vld [vmem:[%s553] sm:$0x3]
      %v861 = vlaneseq
      %v862 = vshrl.u32 %v861, 7
      %v863 = vsub.s32 0, %v862
      %v864 = vrot.slane %v859, %v863
      %v865 = vlaneseq
      %v866 = vshrl.u32 %v865, 7
      %v867 = vsub.s32 1, %v866
      %v868 = vrot.slane %v859, %v867
      %v871 = vmul.f32 %v857, %v864
      %v872 = vmul.f32 %v858, %v868
      %873 = vrot.lane.b32.xlu0 %v731, 111
      %v874 = vpop.permute.xlu0 %873
      %875 = vrot.lane.b32.xlu0 %v732, 111
      %v876 = vpop.permute.xlu0 %875
      %v877 = vsel %vm572, %v874, %v876
      %v878 = vsel %vm572, %v876, %v874
      %v879 = vld [vmem:[%s575] sm:$0x3]
      %v881 = vlaneseq
      %v882 = vshrl.u32 %v881, 7
      %v883 = vsub.s32 0, %v882
      %v884 = vrot.slane %v879, %v883
      %v885 = vlaneseq
      %v886 = vshrl.u32 %v885, 7
      %v887 = vsub.s32 1, %v886
      %v888 = vrot.slane %v879, %v887
      %v891 = vmul.f32 %v877, %v884
      %v892 = vmul.f32 %v878, %v888
      %v893 = vld [vmem:[%s7] sm:$0xf]
      %vm894 = vcmask 588800
      %v896 = vsel %vm894, %v893, 0
      %898 = vmatprep.subr.mxu0 %v752
      %899 = vmatpush1.msra.mxu0 %v751
      %900 = vmatprep.subr.mxu0 %v772
      %901 = vmatpush1.msra.mxu0 %v771
      %902 = vmatprep.subr.mxu0 %v792
      %903 = vmatpush1.msra.mxu0 %v791
      %904 = vmatprep.subr.mxu0 %v812
      %905 = vmatpush1.msra.mxu0 %v811
      %906 = vmatprep.subr.mxu0 %v732
      %907 = vmatpush1.msra.mxu0 %v731
      %908 = vmatprep.subr.mxu0 %v832
      %909 = vmatpush1.msra.mxu0 %v831
      %910 = vmatprep.subr.mxu0 %v852
      %911 = vmatpush1.msra.mxu0 %v851
      %912 = vmatprep.subr.mxu0 %v872
      %913 = vmatpush1.msra.mxu0 %v871
      %914 = vmatprep.subr.mxu0 %v892
      %915 = vmatpush1.msra.mxu0 %v891
      %916 = vmatprep.subr.mxu0 0.0
      %917 = vmatpush1.msra.mxu0 0.0
      %918 = vmatprep.subr.mxu0 0.0
      %919 = vmatpush1.msra.mxu0 0.0
      %920 = vmatprep.subr.mxu0 0.0
      %921 = vmatpush1.msra.mxu0 0.0
      %922 = vmatprep.subr.mxu0 0.0
      %923 = vmatpush1.msra.mxu0 0.0
      %924 = vmatprep.subr.mxu0 0.0
      %925 = vmatpush1.msra.mxu0 0.0
      %926 = vmatprep.subr.mxu0 0.0
      %927 = vmatpush1.msra.mxu0 0.0
      %928 = vmatprep.subr.mxu0 0.0
      %929 = vmatpush1.msra.mxu0 0.0
      %930 = vmatprep.subr.mxu0 0.0
      %931 = vmatpush1.msra.mxu0 0.0
      %932 = vmatprep.subr.mxu0 0.0
      %933 = vmatpush1.msra.mxu0 0.0
      %934 = vmatprep.subr.mxu0 0.0
      %935 = vmatpush1.msra.mxu0 0.0
      %936 = vmatprep.subr.mxu0 0.0
      %937 = vmatpush1.msra.mxu0 0.0
      %938 = vmatprep.subr.mxu0 0.0
      %939 = vmatpush1.msra.mxu0 0.0
      %940 = vmatprep.subr.mxu0 0.0
      %941 = vmatpush1.msra.mxu0 0.0
      %942 = vmatprep.subr.mxu0 0.0
      %943 = vmatpush1.msra.mxu0 0.0
      %944 = vmatprep.subr.mxu0 0.0
      %945 = vmatpush1.msra.mxu0 0.0
      %946 = vmatprep.subr.mxu0 0.0
      %947 = vmatpush1.msra.mxu0 0.0
      %948 = vmatprep.subr.mxu0 0.0
      %949 = vmatpush1.msra.mxu0 0.0
      %950 = vmatprep.subr.mxu0 0.0
      %951 = vmatpush1.msra.mxu0 0.0
      %952 = vmatprep.subr.mxu0 0.0
      %953 = vmatpush1.msra.mxu0 0.0
      %954 = vmatprep.subr.mxu0 0.0
      %955 = vmatpush1.msra.mxu0 0.0
      %956 = vmatprep.subr.mxu0 0.0
      %957 = vmatpush1.msra.mxu0 0.0
      %958 = vmatprep.subr.mxu0 0.0
      %959 = vmatpush1.msra.mxu0 0.0
      %960 = vmatprep.subr.mxu0 0.0
      %961 = vmatpush1.msra.mxu0 0.0
      %962 = vmatprep.mubr.f32.mxu0 0.0
      %963 = vmatmul.mubr.f32.gmra.mrb[0].mxu0 %v896
      %v964 = vpop.f32.mrb[0].mxu0
      %v965 = vadd.f32 0.0, %v964
      %v966 = vpop.f32.mrb[0].mxu0
      %v967 = vadd.f32 0.0, %v966
      %968 = vdwg.mxu0
      %969 = vst [vmem:[%s386 + $0x10] sm:$0xf] %v965
      %970 = vst [vmem:[%s386 + $0x18] sm:$0xf] %v967
      %v971 = vld [vmem:[%s386] sm:$0xff]
      %v972 = vld [vmem:[%s386 + $0x8] sm:$0xff]
      %v973 = vld [vmem:[%s386 + $0x10] sm:$0xf]
      %v974 = vld [vmem:[%s386 + $0x18] sm:$0xf]
      %v975 = vld [vmem:[%s8] sm:$0xff]
      %v976 = vld [vmem:[%s8 + $0x8] sm:$0xf]
      %978 = vset.pattern.permute.xlu0 0
      %979 = vperm.xlu0 %978, %v975
      %v980 = vpop.permute.xlu0 %979
      %983 = vset.pattern.permute.xlu0 0
      %984 = vperm.xlu0 %983, %v976
      %v985 = vpop.permute.xlu0 %984
      %v987 = vmul.f32 %v971, %v980
      %v988 = vmul.f32 %v972, %v980
      %v989 = vmul.f32 %v973, %v985
      %v990 = vmul.f32 %v974, %v985
      %v991 = vld [vmem:[%s9] sm:$0xff]
      %v992 = vld [vmem:[%s9 + $0x8] sm:$0xf]
      %994 = vset.pattern.permute.xlu0 0
      %995 = vperm.xlu0 %994, %v991
      %v996 = vpop.permute.xlu0 %995
      %999 = vset.pattern.permute.xlu0 0
      %1000 = vperm.xlu0 %999, %v992
      %v1001 = vpop.permute.xlu0 %1000
      %v1003 = vadd.f32 %v987, %v996
      %v1004 = vadd.f32 %v988, %v996
      %v1005 = vadd.f32 %v989, %v1001
      %v1006 = vadd.f32 %v990, %v1001
      %v1007 = vmax.f32 %v1003, 0.0
      %v1008 = vmax.f32 %v1004, 0.0
      %v1009 = vmax.f32 %v1005, 0.0
      %v1010 = vmax.f32 %v1006, 0.0
      %1011 = vrot.lane.b32.xlu0 %v1007, 17
      %v1012 = vpop.permute.xlu0 %1011
      %1013 = vrot.lane.b32.xlu0 %v1009, 17
      %v1014 = vpop.permute.xlu0 %1013
      %1015 = vrot.lane.b32.xlu0 %v1008, 17
      %v1016 = vpop.permute.xlu0 %1015
      %1017 = vrot.lane.b32.xlu0 %v1010, 17
      %v1018 = vpop.permute.xlu0 %1017
      %v1019 = vsel %vm419, %v1012, %v1016
      %v1020 = vsel %vm419, %v1014, %v1018
      %v1021 = vsel %vm419, %v1016, %v1012
      %v1022 = vsel %vm419, %v1018, %v1014
      %v1023 = vld [vmem:[%s1] sm:$0x3]
      %v1025 = vlaneseq
      %v1026 = vshrl.u32 %v1025, 7
      %v1027 = vsub.s32 0, %v1026
      %v1028 = vrot.slane %v1023, %v1027
      %v1029 = vlaneseq
      %v1030 = vshrl.u32 %v1029, 7
      %v1031 = vsub.s32 1, %v1030
      %v1032 = vrot.slane %v1023, %v1031
      %v1035 = vmul.f32 %v1021, %v1028
      %v1036 = vmul.f32 %v1019, %v1032
      %v1037 = vmul.f32 %v1022, %v1028
      %v1038 = vmul.f32 %v1020, %v1032
      %1039 = vrot.lane.b32.xlu0 %v1007, 16
      %v1040 = vpop.permute.xlu0 %1039
      %1041 = vrot.lane.b32.xlu0 %v1009, 16
      %v1042 = vpop.permute.xlu0 %1041
      %1043 = vrot.lane.b32.xlu0 %v1008, 16
      %v1044 = vpop.permute.xlu0 %1043
      %1045 = vrot.lane.b32.xlu0 %v1010, 16
      %v1046 = vpop.permute.xlu0 %1045
      %v1047 = vsel %vm440, %v1040, %v1044
      %v1048 = vsel %vm440, %v1042, %v1046
      %v1049 = vsel %vm440, %v1044, %v1040
      %v1050 = vsel %vm440, %v1046, %v1042
      %v1051 = vld [vmem:[%s443] sm:$0x3]
      %v1053 = vlaneseq
      %v1054 = vshrl.u32 %v1053, 7
      %v1055 = vsub.s32 0, %v1054
      %v1056 = vrot.slane %v1051, %v1055
      %v1057 = vlaneseq
      %v1058 = vshrl.u32 %v1057, 7
      %v1059 = vsub.s32 1, %v1058
      %v1060 = vrot.slane %v1051, %v1059
      %v1063 = vmul.f32 %v1049, %v1056
      %v1064 = vmul.f32 %v1047, %v1060
      %v1065 = vmul.f32 %v1050, %v1056
      %v1066 = vmul.f32 %v1048, %v1060
      %1067 = vrot.lane.b32.xlu0 %v1007, 15
      %v1068 = vpop.permute.xlu0 %1067
      %1069 = vrot.lane.b32.xlu0 %v1009, 15
      %v1070 = vpop.permute.xlu0 %1069
      %1071 = vrot.lane.b32.xlu0 %v1008, 15
      %v1072 = vpop.permute.xlu0 %1071
      %1073 = vrot.lane.b32.xlu0 %v1010, 15
      %v1074 = vpop.permute.xlu0 %1073
      %v1075 = vsel %vm462, %v1068, %v1072
      %v1076 = vsel %vm462, %v1070, %v1074
      %v1077 = vsel %vm462, %v1072, %v1068
      %v1078 = vsel %vm462, %v1074, %v1070
      %v1079 = vld [vmem:[%s465] sm:$0x3]
      %v1081 = vlaneseq
      %v1082 = vshrl.u32 %v1081, 7
      %v1083 = vsub.s32 0, %v1082
      %v1084 = vrot.slane %v1079, %v1083
      %v1085 = vlaneseq
      %v1086 = vshrl.u32 %v1085, 7
      %v1087 = vsub.s32 1, %v1086
      %v1088 = vrot.slane %v1079, %v1087
      %v1091 = vmul.f32 %v1077, %v1084
      %v1092 = vmul.f32 %v1075, %v1088
      %v1093 = vmul.f32 %v1078, %v1084
      %v1094 = vmul.f32 %v1076, %v1088
      %1095 = vrot.lane.b32.xlu0 %v1007, 1
      %v1096 = vpop.permute.xlu0 %1095
      %1097 = vrot.lane.b32.xlu0 %v1009, 1
      %v1098 = vpop.permute.xlu0 %1097
      %1099 = vrot.lane.b32.xlu0 %v1008, 1
      %v1100 = vpop.permute.xlu0 %1099
      %1101 = vrot.lane.b32.xlu0 %v1010, 1
      %v1102 = vpop.permute.xlu0 %1101
      %v1103 = vsel %vm484, %v1096, %v1100
      %v1104 = vsel %vm484, %v1098, %v1102
      %v1105 = vsel %vm484, %v1100, %v1096
      %v1106 = vsel %vm484, %v1102, %v1098
      %v1107 = vld [vmem:[%s487] sm:$0x3]
      %v1109 = vlaneseq
      %v1110 = vshrl.u32 %v1109, 7
      %v1111 = vsub.s32 0, %v1110
      %v1112 = vrot.slane %v1107, %v1111
      %v1113 = vlaneseq
      %v1114 = vshrl.u32 %v1113, 7
      %v1115 = vsub.s32 1, %v1114
      %v1116 = vrot.slane %v1107, %v1115
      %v1119 = vmul.f32 %v1105, %v1112
      %v1120 = vmul.f32 %v1103, %v1116
      %v1121 = vmul.f32 %v1106, %v1112
      %v1122 = vmul.f32 %v1104, %v1116
      %1123 = vrot.lane.b32.xlu0 %v1007, 127
      %v1124 = vpop.permute.xlu0 %1123
      %1125 = vrot.lane.b32.xlu0 %v1009, 127
      %v1126 = vpop.permute.xlu0 %1125
      %1127 = vrot.lane.b32.xlu0 %v1008, 127
      %v1128 = vpop.permute.xlu0 %1127
      %1129 = vrot.lane.b32.xlu0 %v1010, 127
      %v1130 = vpop.permute.xlu0 %1129
      %v1131 = vsel %vm506, %v1124, %v1128
      %v1132 = vsel %vm506, %v1126, %v1130
      %v1133 = vsel %vm506, %v1128, %v1124
      %v1134 = vsel %vm506, %v1130, %v1126
      %v1135 = vld [vmem:[%s509] sm:$0x3]
      %v1137 = vlaneseq
      %v1138 = vshrl.u32 %v1137, 7
      %v1139 = vsub.s32 0, %v1138
      %v1140 = vrot.slane %v1135, %v1139
      %v1141 = vlaneseq
      %v1142 = vshrl.u32 %v1141, 7
      %v1143 = vsub.s32 1, %v1142
      %v1144 = vrot.slane %v1135, %v1143
      %v1147 = vmul.f32 %v1131, %v1140
      %v1148 = vmul.f32 %v1133, %v1144
      %v1149 = vmul.f32 %v1132, %v1140
      %v1150 = vmul.f32 %v1134, %v1144
      %1151 = vrot.lane.b32.xlu0 %v1007, 113
      %v1152 = vpop.permute.xlu0 %1151
      %1153 = vrot.lane.b32.xlu0 %v1009, 113
      %v1154 = vpop.permute.xlu0 %1153
      %1155 = vrot.lane.b32.xlu0 %v1008, 113
      %v1156 = vpop.permute.xlu0 %1155
      %1157 = vrot.lane.b32.xlu0 %v1010, 113
      %v1158 = vpop.permute.xlu0 %1157
      %v1159 = vsel %vm528, %v1152, %v1156
      %v1160 = vsel %vm528, %v1154, %v1158
      %v1161 = vsel %vm528, %v1156, %v1152
      %v1162 = vsel %vm528, %v1158, %v1154
      %v1163 = vld [vmem:[%s531] sm:$0x3]
      %v1165 = vlaneseq
      %v1166 = vshrl.u32 %v1165, 7
      %v1167 = vsub.s32 0, %v1166
      %v1168 = vrot.slane %v1163, %v1167
      %v1169 = vlaneseq
      %v1170 = vshrl.u32 %v1169, 7
      %v1171 = vsub.s32 1, %v1170
      %v1172 = vrot.slane %v1163, %v1171
      %v1175 = vmul.f32 %v1159, %v1168
      %v1176 = vmul.f32 %v1161, %v1172
      %v1177 = vmul.f32 %v1160, %v1168
      %v1178 = vmul.f32 %v1162, %v1172
      %1179 = vrot.lane.b32.xlu0 %v1007, 112
      %v1180 = vpop.permute.xlu0 %1179
      %1181 = vrot.lane.b32.xlu0 %v1009, 112
      %v1182 = vpop.permute.xlu0 %1181
      %1183 = vrot.lane.b32.xlu0 %v1008, 112
      %v1184 = vpop.permute.xlu0 %1183
      %1185 = vrot.lane.b32.xlu0 %v1010, 112
      %v1186 = vpop.permute.xlu0 %1185
      %v1187 = vsel %vm550, %v1180, %v1184
      %v1188 = vsel %vm550, %v1182, %v1186
      %v1189 = vsel %vm550, %v1184, %v1180
      %v1190 = vsel %vm550, %v1186, %v1182
      %v1191 = vld [vmem:[%s553] sm:$0x3]
      %v1193 = vlaneseq
      %v1194 = vshrl.u32 %v1193, 7
      %v1195 = vsub.s32 0, %v1194
      %v1196 = vrot.slane %v1191, %v1195
      %v1197 = vlaneseq
      %v1198 = vshrl.u32 %v1197, 7
      %v1199 = vsub.s32 1, %v1198
      %v1200 = vrot.slane %v1191, %v1199
      %v1203 = vmul.f32 %v1187, %v1196
      %v1204 = vmul.f32 %v1189, %v1200
      %v1205 = vmul.f32 %v1188, %v1196
      %v1206 = vmul.f32 %v1190, %v1200
      %1207 = vrot.lane.b32.xlu0 %v1007, 111
      %v1208 = vpop.permute.xlu0 %1207
      %1209 = vrot.lane.b32.xlu0 %v1009, 111
      %v1210 = vpop.permute.xlu0 %1209
      %1211 = vrot.lane.b32.xlu0 %v1008, 111
      %v1212 = vpop.permute.xlu0 %1211
      %1213 = vrot.lane.b32.xlu0 %v1010, 111
      %v1214 = vpop.permute.xlu0 %1213
      %v1215 = vsel %vm572, %v1208, %v1212
      %v1216 = vsel %vm572, %v1210, %v1214
      %v1217 = vsel %vm572, %v1212, %v1208
      %v1218 = vsel %vm572, %v1214, %v1210
      %v1219 = vld [vmem:[%s575] sm:$0x3]
      %v1221 = vlaneseq
      %v1222 = vshrl.u32 %v1221, 7
      %v1223 = vsub.s32 0, %v1222
      %v1224 = vrot.slane %v1219, %v1223
      %v1225 = vlaneseq
      %v1226 = vshrl.u32 %v1225, 7
      %v1227 = vsub.s32 1, %v1226
      %v1228 = vrot.slane %v1219, %v1227
      %v1231 = vmul.f32 %v1215, %v1224
      %v1232 = vmul.f32 %v1217, %v1228
      %v1233 = vmul.f32 %v1216, %v1224
      %v1234 = vmul.f32 %v1218, %v1228
      %v1239 = vrot.slane %v1063, 4
      %v1240 = vrot.slane %v1064, 4
      %v1241 = vrot.slane %v1065, 4
      %v1242 = vsel %vm614, %v1239, %v1241
      %v1243 = vrot.slane %v1066, 4
      %v1244 = vsel %vm614, %v1240, %v1243
      %v1253 = vrot.slane %v1119, 4
      %v1254 = vrot.slane %v1120, 4
      %v1255 = vrot.slane %v1121, 4
      %v1256 = vsel %vm614, %v1253, %v1255
      %v1257 = vrot.slane %v1122, 4
      %v1258 = vsel %vm614, %v1254, %v1257
      %v1267 = vrot.slane %v1147, 4
      %v1268 = vrot.slane %v1148, 4
      %v1269 = vrot.slane %v1149, 4
      %v1270 = vsel %vm614, %v1267, %v1269
      %v1271 = vrot.slane %v1150, 4
      %v1272 = vsel %vm614, %v1268, %v1271
      %v1281 = vrot.slane %v1203, 4
      %v1282 = vrot.slane %v1204, 4
      %v1283 = vrot.slane %v1205, 4
      %v1284 = vsel %vm614, %v1281, %v1283
      %v1285 = vrot.slane %v1206, 4
      %v1286 = vsel %vm614, %v1282, %v1285
      %v1291 = vsel %vm614, %v1037, %v1239
      %v1292 = vsel %vm614, %v1038, %v1240
      %v1293 = vsel %vm614, %v1093, %v1253
      %v1294 = vsel %vm614, %v1094, %v1254
      %v1295 = vsel %vm614, %v1009, %v1267
      %v1296 = vsel %vm614, %v1010, %v1268
      %v1297 = vsel %vm614, %v1177, %v1281
      %v1298 = vsel %vm614, %v1178, %v1282
      %v1299 = vld [vmem:[%s10] sm:$0xf]
      %vm1300 = vcmask 883712
      %v1302 = vsel %vm1300, %v1299, 0
      %v1305 = vsel %vm614, %v1233, 0
      %v1308 = vsel %vm614, %v1234, 0
      %1310 = vmatprep.subr.mxu0 %v1036
      %1311 = vmatpush1.msra.mxu0 %v1035
      %1312 = vmatprep.subr.mxu0 %v1292
      %1313 = vmatpush1.msra.mxu0 %v1291
      %1314 = vmatprep.subr.mxu0 %v1244
      %1315 = vmatpush1.msra.mxu0 %v1242
      %1316 = vmatprep.subr.mxu0 %v1092
      %1317 = vmatpush1.msra.mxu0 %v1091
      %1318 = vmatprep.subr.mxu0 %v1294
      %1319 = vmatpush1.msra.mxu0 %v1293
      %1320 = vmatprep.subr.mxu0 %v1258
      %1321 = vmatpush1.msra.mxu0 %v1256
      %1322 = vmatprep.subr.mxu0 %v1008
      %1323 = vmatpush1.msra.mxu0 %v1007
      %1324 = vmatprep.subr.mxu0 %v1296
      %1325 = vmatpush1.msra.mxu0 %v1295
      %1326 = vmatprep.subr.mxu0 %v1272
      %1327 = vmatpush1.msra.mxu0 %v1270
      %1328 = vmatprep.subr.mxu0 %v1176
      %1329 = vmatpush1.msra.mxu0 %v1175
      %1330 = vmatprep.subr.mxu0 %v1298
      %1331 = vmatpush1.msra.mxu0 %v1297
      %1332 = vmatprep.subr.mxu0 %v1286
      %1333 = vmatpush1.msra.mxu0 %v1284
      %1334 = vmatprep.subr.mxu0 %v1232
      %1335 = vmatpush1.msra.mxu0 %v1231
      %1336 = vmatprep.subr.mxu0 %v1308
      %1337 = vmatpush1.msra.mxu0 %v1305
      %1338 = vmatprep.subr.mxu0 0.0
      %1339 = vmatpush1.msra.mxu0 0.0
      %1340 = vmatprep.subr.mxu0 0.0
      %1341 = vmatpush1.msra.mxu0 0.0
      %1342 = vmatprep.subr.mxu0 0.0
      %1343 = vmatpush1.msra.mxu0 0.0
      %1344 = vmatprep.subr.mxu0 0.0
      %1345 = vmatpush1.msra.mxu0 0.0
      %1346 = vmatprep.subr.mxu0 0.0
      %1347 = vmatpush1.msra.mxu0 0.0
      %1348 = vmatprep.subr.mxu0 0.0
      %1349 = vmatpush1.msra.mxu0 0.0
      %1350 = vmatprep.subr.mxu0 0.0
      %1351 = vmatpush1.msra.mxu0 0.0
      %1352 = vmatprep.subr.mxu0 0.0
      %1353 = vmatpush1.msra.mxu0 0.0
      %1354 = vmatprep.subr.mxu0 0.0
      %1355 = vmatpush1.msra.mxu0 0.0
      %1356 = vmatprep.subr.mxu0 0.0
      %1357 = vmatpush1.msra.mxu0 0.0
      %1358 = vmatprep.subr.mxu0 0.0
      %1359 = vmatpush1.msra.mxu0 0.0
      %1360 = vmatprep.subr.mxu0 0.0
      %1361 = vmatpush1.msra.mxu0 0.0
      %1362 = vmatprep.subr.mxu0 0.0
      %1363 = vmatpush1.msra.mxu0 0.0
      %1364 = vmatprep.subr.mxu0 0.0
      %1365 = vmatpush1.msra.mxu0 0.0
      %1366 = vmatprep.subr.mxu0 0.0
      %1367 = vmatpush1.msra.mxu0 0.0
      %1368 = vmatprep.subr.mxu0 0.0
      %1369 = vmatpush1.msra.mxu0 0.0
      %1370 = vmatprep.subr.mxu0 0.0
      %1371 = vmatpush1.msra.mxu0 0.0
      %1372 = vmatprep.subr.mxu0 0.0
      %1373 = vmatpush1.msra.mxu0 0.0
      %1374 = vmatprep.mubr.f32.mxu0 0.0
      %1375 = vmatmul.mubr.f32.gmra.mrb[0].mxu0 %v1302
      %v1376 = vpop.f32.mrb[0].mxu0
      %v1377 = vadd.f32 0.0, %v1376
      %v1378 = vpop.f32.mrb[0].mxu0
      %v1379 = vadd.f32 0.0, %v1378
      %1380 = vdwg.mxu0
      %v1383 = vrot.slane %v1377, 4
      %v1384 = vrot.slane %v1379, 4
      %1387 = vst [vmem:[%s386 + $0x10] sm:$0xf0] %v1383
      %1388 = vst [vmem:[%s386 + $0x18] sm:$0xf0] %v1384
      %p1389 = scmp.lt.s32.totalorder %s22, 1
      %s1390 = scalar_select %p1389, %s22, 1
      %s1391 = smul.addr %s1390, 4
      %s1392 = smul.addr %s1391, 8
      %s1393 = scalar_lea.vmem %s11, %s1392
      // Predicated region
      $region65: #{dense_block_forward.1} parent=63 // pred_check
        %p1394 = pneg %p276
      $region66: #{dense_block_forward.1} parent=63 // pred_check_branch
        %1396 = sbr.rel (%p1394) target = $region68
      $region67: #{dense_block_forward.1} parent=63 // pred_region
        _
      $region68: #{dense_block_forward.1} parent=63 // pred_fallthru
        _
    $region64: #{dense_block_forward.1} parent=5 // pred_fallthru
      _
    %p1397 = scmp.le.s32.totalorder 2, %s17
    // Predicated region
    $region69: #{dense_block_forward.1} parent=5 // pred_check
      %p1398 = pneg %p1397
    $region70: #{dense_block_forward.1} parent=5 // pred_check_branch
      %1400 = sbr.rel (%p1398) target = $region72
    $region71: #{dense_block_forward.1} parent=5 // pred_region
      %s1401 = ssub.s32 %s17, 2
      // Predicated region
      $region73: #{dense_block_forward.1} parent=71 // pred_check
        %p1402 = pneg %p282
      $region74: #{dense_block_forward.1} parent=71 // pred_check_branch
        %1404 = sbr.rel (%p1402) target = $region76
      $region75: #{dense_block_forward.1} parent=71 // pred_region
        %p1405 = scmp.lt.s32.totalorder %s23, 1
        %s1406 = scalar_select %p1405, %s23, 1
        %s1407 = smul.addr %s1406, 4
        %s1408 = smul.addr %s1407, 8
        %s1409 = scalar_lea.vmem %s11, %s1408
      $region76: #{dense_block_forward.1} parent=71 // pred_fallthru
        _
    $region72: #{dense_block_forward.1} parent=5 // pred_fallthru
      _
  $region6: #{dense_block_forward.1} parent=0 // loop_footer
    %s21 = sadd.s32 1, %s17
  $region7: #{dense_block_forward.1} parent=0 // loop_footer_branch
    %16 = sbr.rel target = $region3
  $region8: #{dense_block_forward.1} parent=0 // loop_exit
    _

</llo_original>
